<compile_context>
chip_gen: v5e
topology: v5e:2x2
jax: 0.10.0
libtpu: 0.0.40
codegen_flags: <defaults>
</compile_context>

<pallas_src>
import jax
import jax.numpy as jnp
import numpy as np
from jax.experimental import pallas as pl
from jax.experimental.pallas import tpu as pltpu

HIDDEN = 128      # hidden_size default of the module
INPUT_SIZE = 1    # input_size default of the module


def _lstm_fc_kernel(x_ref,                         # (S, B, 1) time-major input, f32
                    wih0_ref, b0_ref,              # (1,4H) f32, (1,4H) f32
                    whh0_ref,                      # (H,4H)  bf16
                    w1_ref, b1_ref,                # (2H,4H) bf16 = [wih1; whh1], (1,4H) f32
                    fcw_ref, fcb_ref,              # (1,H) f32, (1,1) f32
                    out_ref):                      # (B, 1) f32
    S, B, _ = x_ref.shape
    H = whh0_ref.shape[0]

    # ---- Hoisted loop-invariant loads / broadcasts (read each ref once). ----
    wih0 = wih0_ref[...]                                    # (1, 4H)
    b0 = b0_ref[...]                                        # (1, 4H)
    whh0 = whh0_ref[...]                                    # (H, 4H)  bf16
    w1 = w1_ref[...]                                        # (2H, 4H) bf16
    b1 = jnp.broadcast_to(b1_ref[...], (B, 4 * H))          # hoisted broadcast
    fcw = fcw_ref[...]                                      # (1, H)
    fcb = fcb_ref[...]                                      # (1, 1)

    # Layer-0 input projection for all timesteps at once, kept in vregs
    # (no VMEM scratch / round-trip on the recurrent critical path).
    # input_size == 1 -> lane broadcast instead of a degenerate matmul.
    xw0 = x_ref[...] * wih0[None, :, :] + b0[None, :, :]    # (S, B, 4H)

    def sigmoid(v):
        # one EUP tanh push per slab instead of exp + reciprocal
        return 0.5 * (1.0 + jnp.tanh(0.5 * v))

    def cell(gates, c_prev):
        # gate columns pre-ordered (i, f, o, g): one wide sigmoid + one tanh
        sig = sigmoid(gates[:, :3 * H])
        i = sig[:, 0:H]
        f = sig[:, H:2 * H]
        o = sig[:, 2 * H:3 * H]
        g = jnp.tanh(gates[:, 3 * H:])
        c_new = f * c_prev + i * g
        h_new = o * jnp.tanh(c_new)
        return h_new, c_new

    z = jnp.zeros((B, H), jnp.float32)
    h0, c0, h1, c1 = z, z, z, z

    # S is small & static: fully unrolled; h/c state stays in vregs and xw0[t]
    # is a static slice (no dynamic indexing on the serial chain).
    for t in range(S):
        # layer 0: bf16 weights, f32 accumulation
        gates0 = xw0[t] + jnp.dot(h0.astype(jnp.bfloat16), whh0,
                                  preferred_element_type=jnp.float32)
        h0, c0 = cell(gates0, c0)
        # layer 1: single fused matmul [h0_new, h1_prev] @ [wih1; whh1]
        # (dropout on h0 is identity in eval mode)
        hcat = jnp.concatenate([h0, h1], axis=1).astype(jnp.bfloat16)   # (B, 2H)
        gates1 = jnp.dot(hcat, w1, preferred_element_type=jnp.float32) + b1
        h1, c1 = cell(gates1, c1)

    # fc on the last timestep's layer-1 hidden state: VPU mul + XLU lane reduce.
    out_ref[...] = jnp.sum(h1 * fcw, axis=-1, keepdims=True) + fcb


@jax.jit
def lstm_model_forward(x, packed):
    """x: (B, S, 1) float32, packed = pack_params(params) -> (B, 1) float32."""
    B, S, F = x.shape
    H = HIDDEN
    assert F == INPUT_SIZE, "kernel hard-codes input_size == 1"

    # Pad batch to a full sublane group (multiple of 8, at least 8): per-step
    # latency is unchanged, so padded rows are free and real rows fill vregs.
    Bp = max(8, ((B + 7) // 8) * 8)
    if Bp != B:
        x = jnp.pad(x, ((0, Bp - B), (0, 0), (0, 0)))
    x_tm = jnp.transpose(x, (1, 0, 2))  # time-major (S, Bp, 1)

    in_specs = [
        pl.BlockSpec((S, Bp, F), lambda i: (0, 0, 0)),      # x
        pl.BlockSpec((1, 4 * H), lambda i: (0, 0)),         # wih0
        pl.BlockSpec((1, 4 * H), lambda i: (0, 0)),         # b0
        pl.BlockSpec((H, 4 * H), lambda i: (0, 0)),         # whh0 (bf16)
        pl.BlockSpec((2 * H, 4 * H), lambda i: (0, 0)),     # stacked layer-1 W (bf16)
        pl.BlockSpec((1, 4 * H), lambda i: (0, 0)),         # b1
        pl.BlockSpec((1, H), lambda i: (0, 0)),              # fc weight row
        pl.BlockSpec((1, 1), lambda i: (0, 0)),              # fc bias
    ]

    out = pl.pallas_call(
        _lstm_fc_kernel,
        out_shape=jax.ShapeDtypeStruct((Bp, 1), jnp.float32),
        grid=(1,),
        in_specs=in_specs,
        out_specs=pl.BlockSpec((Bp, 1), lambda i: (0, 0)),
        compiler_params=pltpu.CompilerParams(
            dimension_semantics=("arbitrary",)),
    )(x_tm,
      packed["wih0"], packed["b0"], packed["whh0"],
      packed["w1"], packed["b1"],
      packed["fcw"], packed["fcb"])
    return out[:B]


def init_params(key, hidden=HIDDEN, input_size=INPUT_SIZE):
    """Deterministic init mimicking PyTorch's U(-1/sqrt(H), 1/sqrt(H)).

    Stored in PyTorch gate order (i, f, g, o), weights already transposed to
    (in, 4H), biases combined (b_ih + b_hh) as (1, 4H)."""
    H = hidden
    k = 1.0 / np.sqrt(H)
    keys = jax.random.split(key, 12)

    def u(k_, shape, bound):
        return jax.random.uniform(k_, shape, jnp.float32, -bound, bound)

    wih0 = u(keys[0], (input_size, 4 * H), k)
    whh0 = u(keys[1], (H, 4 * H), k)
    b0 = u(keys[2], (1, 4 * H), k) + u(keys[3], (1, 4 * H), k)
    wih1 = u(keys[4], (H, 4 * H), k)
    whh1 = u(keys[5], (H, 4 * H), k)
    b1 = u(keys[6], (1, 4 * H), k) + u(keys[7], (1, 4 * H), k)
    fcw = u(keys[8], (H, 1), k)
    fcb = u(keys[9], (1, 1), k)
    return dict(wih0=wih0, whh0=whh0, b0=b0,
                wih1=wih1, whh1=whh1, b1=b1,
                fcw=fcw, fcb=fcb)


def pack_params(p, hidden=HIDDEN):
    """One-time repack for the kernel: gate columns (i,f,g,o)->(i,f,o,g),
    layer-1 weights stacked to (2H,4H), recurrent MXU weights cast to bf16,
    fc weight as a (1,H) row.  Biases and elementwise weights stay f32."""
    H = hidden

    def reorder(w):
        i, f, g, o = (w[:, 0:H], w[:, H:2 * H], w[:, 2 * H:3 * H], w[:, 3 * H:4 * H])
        return jnp.concatenate([i, f, o, g], axis=1)

    return dict(
        wih0=reorder(p["wih0"]),                                 # (1,4H) f32, elementwise
        b0=reorder(p["b0"]),
        whh0=reorder(p["whh0"]).astype(jnp.bfloat16),            # (H,4H)  bf16 MXU weight
        w1=jnp.concatenate([reorder(p["wih1"]), reorder(p["whh1"])],
                           axis=0).astype(jnp.bfloat16),         # (2H,4H) bf16 MXU weight
        b1=reorder(p["b1"]),
        fcw=jnp.transpose(p["fcw"]),                             # (1, H)
        fcb=p["fcb"],                                            # (1, 1)
    )


def lstm_model_reference(x, p):
    """Pure-JAX f32 reference matching PyTorch LSTM (eval) + Linear semantics."""
    B, S, F = x.shape
    H = HIDDEN

    def layer(inp, wih, whh, b):
        def step(carry, x_t):
            h, c = carry
            g = x_t @ wih + h @ whh + b
            i = jax.nn.sigmoid(g[:, 0:H])
            f = jax.nn.sigmoid(g[:, H:2 * H])
            gg = jnp.tanh(g[:, 2 * H:3 * H])
            o = jax.nn.sigmoid(g[:, 3 * H:4 * H])
            c = f * c + i * gg
            h = o * jnp.tanh(c)
            return (h, c), h
        init = (jnp.zeros((B, H), jnp.float32), jnp.zeros((B, H), jnp.float32))
        _, hs = jax.lax.scan(step, init, jnp.transpose(inp, (1, 0, 2)))
        return jnp.transpose(hs, (1, 0, 2))

    h1 = layer(x, p["wih0"], p["whh0"], p["b0"])
    h2 = layer(h1, p["wih1"], p["whh1"], p["b1"])
    return h2[:, -1, :] @ p["fcw"] + p["fcb"]


if __name__ == "__main__":
    key = jax.random.PRNGKey(0)
    kx, kp = jax.random.split(key)

    B, S = 2, 8
    x = jax.random.normal(kx, (B, S, INPUT_SIZE), jnp.float32)
    params = init_params(kp)
    packed = pack_params(params)

    out = jax.block_until_ready(lstm_model_forward(x, packed))
    ref = jax.block_until_ready(lstm_model_reference(x, params))

    # Tolerance widened vs the pure-f32 version because recurrent MXU weights
    # are stored in bf16 (accumulation and h/c state remain f32).
    np.testing.assert_allclose(np.asarray(out), np.asarray(ref),
                               rtol=2e-2, atol=2e-2)

    assert out.shape == (B, 1)
    print("KERNEL_OK")
</pallas_src>

<mosaic_0001>
module attributes {stable_mosaic.version = 11 : i64} {
  func.func @_lstm_fc_kernel(%arg0: i32, %arg1: memref<8x8x1xf32, #tpu.memory_space<vmem>>, %arg2: memref<1x512xf32, #tpu.memory_space<vmem>>, %arg3: memref<1x512xf32, #tpu.memory_space<vmem>>, %arg4: memref<128x512xbf16, #tpu.memory_space<vmem>>, %arg5: memref<256x512xbf16, #tpu.memory_space<vmem>>, %arg6: memref<1x512xf32, #tpu.memory_space<vmem>>, %arg7: memref<1x128xf32, #tpu.memory_space<vmem>>, %arg8: memref<1x1xf32, #tpu.memory_space<vmem>>, %arg9: memref<8x1xf32, #tpu.memory_space<vmem>>) attributes {dimension_semantics = [#tpu.dimension_semantics<arbitrary>], iteration_bounds = array<i64: 1>, scalar_prefetch = 0 : i64, scratch_operands = 0 : i64, tpu.core_type = #tpu.core_type<tc>, window_params = [{pipeline_mode = #tpu.pipeline_mode<synchronous>, transform_indices = @transform_0, window_bounds = array<i64: 8, 8, 1>}, {pipeline_mode = #tpu.pipeline_mode<synchronous>, transform_indices = @transform_1, window_bounds = array<i64: 1, 512>}, {pipeline_mode = #tpu.pipeline_mode<synchronous>, transform_indices = @transform_2, window_bounds = array<i64: 1, 512>}, {pipeline_mode = #tpu.pipeline_mode<synchronous>, transform_indices = @transform_3, window_bounds = array<i64: 128, 512>}, {pipeline_mode = #tpu.pipeline_mode<synchronous>, transform_indices = @transform_4, window_bounds = array<i64: 256, 512>}, {pipeline_mode = #tpu.pipeline_mode<synchronous>, transform_indices = @transform_5, window_bounds = array<i64: 1, 512>}, {pipeline_mode = #tpu.pipeline_mode<synchronous>, transform_indices = @transform_6, window_bounds = array<i64: 1, 128>}, {pipeline_mode = #tpu.pipeline_mode<synchronous>, transform_indices = @transform_7, window_bounds = array<i64: 1, 1>}, {pipeline_mode = #tpu.pipeline_mode<synchronous>, transform_indices = @transform_8, window_bounds = array<i64: 8, 1>}]} {
    %c0 = arith.constant 0 : index
    %c0_0 = arith.constant 0 : index
    %0 = vector.load %arg2[%c0, %c0_0] : memref<1x512xf32, #tpu.memory_space<vmem>>, vector<1x512xf32>
    %c0_1 = arith.constant 0 : index
    %c0_2 = arith.constant 0 : index
    %1 = vector.load %arg3[%c0_1, %c0_2] : memref<1x512xf32, #tpu.memory_space<vmem>>, vector<1x512xf32>
    %c0_3 = arith.constant 0 : index
    %c0_4 = arith.constant 0 : index
    %2 = vector.load %arg4[%c0_3, %c0_4] : memref<128x512xbf16, #tpu.memory_space<vmem>>, vector<128x512xbf16>
    %c0_5 = arith.constant 0 : index
    %c0_6 = arith.constant 0 : index
    %3 = vector.load %arg5[%c0_5, %c0_6] : memref<256x512xbf16, #tpu.memory_space<vmem>>, vector<256x512xbf16>
    %c0_7 = arith.constant 0 : index
    %c0_8 = arith.constant 0 : index
    %4 = vector.load %arg6[%c0_7, %c0_8] : memref<1x512xf32, #tpu.memory_space<vmem>>, vector<1x512xf32>
    %5 = vector.shape_cast %4 : vector<1x512xf32> to vector<1x512xf32>
    %6 = vector.broadcast %5 : vector<1x512xf32> to vector<8x512xf32>
    %c0_9 = arith.constant 0 : index
    %c0_10 = arith.constant 0 : index
    %7 = vector.load %arg7[%c0_9, %c0_10] : memref<1x128xf32, #tpu.memory_space<vmem>>, vector<1x128xf32>
    %c0_11 = arith.constant 0 : index
    %c0_12 = arith.constant 0 : index
    %8 = vector.load %arg8[%c0_11, %c0_12] : memref<1x1xf32, #tpu.memory_space<vmem>>, vector<1x1xf32>
    %c0_13 = arith.constant 0 : index
    %c0_14 = arith.constant 0 : index
    %c0_15 = arith.constant 0 : index
    %9 = vector.load %arg1[%c0_13, %c0_14, %c0_15] : memref<8x8x1xf32, #tpu.memory_space<vmem>>, vector<8x8x1xf32>
    %10 = vector.shape_cast %0 : vector<1x512xf32> to vector<1x1x512xf32>
    %11 = vector.broadcast %9 : vector<8x8x1xf32> to vector<8x8x512xf32>
    %12 = vector.broadcast %10 : vector<1x1x512xf32> to vector<8x8x512xf32>
    %13 = arith.mulf %11, %12 : vector<8x8x512xf32>
    %14 = vector.shape_cast %1 : vector<1x512xf32> to vector<1x1x512xf32>
    %15 = vector.broadcast %14 : vector<1x1x512xf32> to vector<8x8x512xf32>
    %16 = arith.addf %13, %15 : vector<8x8x512xf32>
    %cst = arith.constant 0.000000e+00 : f32
    %17 = vector.broadcast %cst : f32 to vector<8x128xf32>
    %18 = vector.extract_strided_slice %16 {offsets = [0, 0, 0], sizes = [1, 8, 512], strides = [1, 1, 1]} : vector<8x8x512xf32> to vector<1x8x512xf32>
    %19 = vector.shape_cast %18 : vector<1x8x512xf32> to vector<8x512xf32>
    %20 = arith.truncf %17 : vector<8x128xf32> to vector<8x128xbf16>
    %cst_16 = arith.constant dense<0.000000e+00> : vector<8x512xf32>
    %21 = tpu.matmul %20, %2, %cst_16 {dimension_numbers = #tpu.dot_dimension_numbers<[1], [0], [0], [1], [0, 0, 1, 1], [], []>} : vector<8x128xbf16>, vector<128x512xbf16>, vector<8x512xf32> -> vector<8x512xf32>
    %22 = arith.addf %19, %21 : vector<8x512xf32>
    %23 = vector.extract_strided_slice %22 {offsets = [0, 0], sizes = [8, 384], strides = [1, 1]} : vector<8x512xf32> to vector<8x384xf32>
    %cst_17 = arith.constant 5.000000e-01 : f32
    %24 = vector.broadcast %cst_17 : f32 to vector<8x384xf32>
    %25 = arith.mulf %24, %23 : vector<8x384xf32>
    %26 = math.tanh %25 : vector<8x384xf32>
    %cst_18 = arith.constant 1.000000e+00 : f32
    %27 = vector.broadcast %cst_18 : f32 to vector<8x384xf32>
    %28 = arith.addf %27, %26 : vector<8x384xf32>
    %cst_19 = arith.constant 5.000000e-01 : f32
    %29 = vector.broadcast %cst_19 : f32 to vector<8x384xf32>
    %30 = arith.mulf %29, %28 : vector<8x384xf32>
    %31 = vector.extract_strided_slice %30 {offsets = [0, 0], sizes = [8, 128], strides = [1, 1]} : vector<8x384xf32> to vector<8x128xf32>
    %32 = vector.extract_strided_slice %30 {offsets = [0, 128], sizes = [8, 128], strides = [1, 1]} : vector<8x384xf32> to vector<8x128xf32>
    %33 = vector.extract_strided_slice %30 {offsets = [0, 256], sizes = [8, 128], strides = [1, 1]} : vector<8x384xf32> to vector<8x128xf32>
    %34 = vector.extract_strided_slice %22 {offsets = [0, 384], sizes = [8, 128], strides = [1, 1]} : vector<8x512xf32> to vector<8x128xf32>
    %35 = math.tanh %34 : vector<8x128xf32>
    %36 = arith.mulf %32, %17 : vector<8x128xf32>
    %37 = arith.mulf %31, %35 : vector<8x128xf32>
    %38 = arith.addf %36, %37 : vector<8x128xf32>
    %39 = math.tanh %38 : vector<8x128xf32>
    %40 = arith.mulf %33, %39 : vector<8x128xf32>
    %41 = tpu.concatenate %40, %17 in 1 : vector<8x128xf32>, vector<8x128xf32> -> vector<8x256xf32>
    %42 = arith.truncf %41 : vector<8x256xf32> to vector<8x256xbf16>
    %cst_20 = arith.constant dense<0.000000e+00> : vector<8x512xf32>
    %43 = tpu.matmul %42, %3, %cst_20 {dimension_numbers = #tpu.dot_dimension_numbers<[1], [0], [0], [1], [0, 0, 1, 1], [], []>} : vector<8x256xbf16>, vector<256x512xbf16>, vector<8x512xf32> -> vector<8x512xf32>
    %44 = arith.addf %43, %6 : vector<8x512xf32>
    %45 = vector.extract_strided_slice %44 {offsets = [0, 0], sizes = [8, 384], strides = [1, 1]} : vector<8x512xf32> to vector<8x384xf32>
    %cst_21 = arith.constant 5.000000e-01 : f32
    %46 = vector.broadcast %cst_21 : f32 to vector<8x384xf32>
    %47 = arith.mulf %46, %45 : vector<8x384xf32>
    %48 = math.tanh %47 : vector<8x384xf32>
    %cst_22 = arith.constant 1.000000e+00 : f32
    %49 = vector.broadcast %cst_22 : f32 to vector<8x384xf32>
    %50 = arith.addf %49, %48 : vector<8x384xf32>
    %cst_23 = arith.constant 5.000000e-01 : f32
    %51 = vector.broadcast %cst_23 : f32 to vector<8x384xf32>
    %52 = arith.mulf %51, %50 : vector<8x384xf32>
    %53 = vector.extract_strided_slice %52 {offsets = [0, 0], sizes = [8, 128], strides = [1, 1]} : vector<8x384xf32> to vector<8x128xf32>
    %54 = vector.extract_strided_slice %52 {offsets = [0, 128], sizes = [8, 128], strides = [1, 1]} : vector<8x384xf32> to vector<8x128xf32>
    %55 = vector.extract_strided_slice %52 {offsets = [0, 256], sizes = [8, 128], strides = [1, 1]} : vector<8x384xf32> to vector<8x128xf32>
    %56 = vector.extract_strided_slice %44 {offsets = [0, 384], sizes = [8, 128], strides = [1, 1]} : vector<8x512xf32> to vector<8x128xf32>
    %57 = math.tanh %56 : vector<8x128xf32>
    %58 = arith.mulf %54, %17 : vector<8x128xf32>
    %59 = arith.mulf %53, %57 : vector<8x128xf32>
    %60 = arith.addf %58, %59 : vector<8x128xf32>
    %61 = math.tanh %60 : vector<8x128xf32>
    %62 = arith.mulf %55, %61 : vector<8x128xf32>
    %63 = vector.extract_strided_slice %16 {offsets = [1, 0, 0], sizes = [1, 8, 512], strides = [1, 1, 1]} : vector<8x8x512xf32> to vector<1x8x512xf32>
    %64 = vector.shape_cast %63 : vector<1x8x512xf32> to vector<8x512xf32>
    %65 = arith.truncf %40 : vector<8x128xf32> to vector<8x128xbf16>
    %cst_24 = arith.constant dense<0.000000e+00> : vector<8x512xf32>
    %66 = tpu.matmul %65, %2, %cst_24 {dimension_numbers = #tpu.dot_dimension_numbers<[1], [0], [0], [1], [0, 0, 1, 1], [], []>} : vector<8x128xbf16>, vector<128x512xbf16>, vector<8x512xf32> -> vector<8x512xf32>
    %67 = arith.addf %64, %66 : vector<8x512xf32>
    %68 = vector.extract_strided_slice %67 {offsets = [0, 0], sizes = [8, 384], strides = [1, 1]} : vector<8x512xf32> to vector<8x384xf32>
    %cst_25 = arith.constant 5.000000e-01 : f32
    %69 = vector.broadcast %cst_25 : f32 to vector<8x384xf32>
    %70 = arith.mulf %69, %68 : vector<8x384xf32>
    %71 = math.tanh %70 : vector<8x384xf32>
    %cst_26 = arith.constant 1.000000e+00 : f32
    %72 = vector.broadcast %cst_26 : f32 to vector<8x384xf32>
    %73 = arith.addf %72, %71 : vector<8x384xf32>
    %cst_27 = arith.constant 5.000000e-01 : f32
    %74 = vector.broadcast %cst_27 : f32 to vector<8x384xf32>
    %75 = arith.mulf %74, %73 : vector<8x384xf32>
    %76 = vector.extract_strided_slice %75 {offsets = [0, 0], sizes = [8, 128], strides = [1, 1]} : vector<8x384xf32> to vector<8x128xf32>
    %77 = vector.extract_strided_slice %75 {offsets = [0, 128], sizes = [8, 128], strides = [1, 1]} : vector<8x384xf32> to vector<8x128xf32>
    %78 = vector.extract_strided_slice %75 {offsets = [0, 256], sizes = [8, 128], strides = [1, 1]} : vector<8x384xf32> to vector<8x128xf32>
    %79 = vector.extract_strided_slice %67 {offsets = [0, 384], sizes = [8, 128], strides = [1, 1]} : vector<8x512xf32> to vector<8x128xf32>
    %80 = math.tanh %79 : vector<8x128xf32>
    %81 = arith.mulf %77, %38 : vector<8x128xf32>
    %82 = arith.mulf %76, %80 : vector<8x128xf32>
    %83 = arith.addf %81, %82 : vector<8x128xf32>
    %84 = math.tanh %83 : vector<8x128xf32>
    %85 = arith.mulf %78, %84 : vector<8x128xf32>
    %86 = tpu.concatenate %85, %62 in 1 : vector<8x128xf32>, vector<8x128xf32> -> vector<8x256xf32>
    %87 = arith.truncf %86 : vector<8x256xf32> to vector<8x256xbf16>
    %cst_28 = arith.constant dense<0.000000e+00> : vector<8x512xf32>
    %88 = tpu.matmul %87, %3, %cst_28 {dimension_numbers = #tpu.dot_dimension_numbers<[1], [0], [0], [1], [0, 0, 1, 1], [], []>} : vector<8x256xbf16>, vector<256x512xbf16>, vector<8x512xf32> -> vector<8x512xf32>
    %89 = arith.addf %88, %6 : vector<8x512xf32>
    %90 = vector.extract_strided_slice %89 {offsets = [0, 0], sizes = [8, 384], strides = [1, 1]} : vector<8x512xf32> to vector<8x384xf32>
    %cst_29 = arith.constant 5.000000e-01 : f32
    %91 = vector.broadcast %cst_29 : f32 to vector<8x384xf32>
    %92 = arith.mulf %91, %90 : vector<8x384xf32>
    %93 = math.tanh %92 : vector<8x384xf32>
    %cst_30 = arith.constant 1.000000e+00 : f32
    %94 = vector.broadcast %cst_30 : f32 to vector<8x384xf32>
    %95 = arith.addf %94, %93 : vector<8x384xf32>
    %cst_31 = arith.constant 5.000000e-01 : f32
    %96 = vector.broadcast %cst_31 : f32 to vector<8x384xf32>
    %97 = arith.mulf %96, %95 : vector<8x384xf32>
    %98 = vector.extract_strided_slice %97 {offsets = [0, 0], sizes = [8, 128], strides = [1, 1]} : vector<8x384xf32> to vector<8x128xf32>
    %99 = vector.extract_strided_slice %97 {offsets = [0, 128], sizes = [8, 128], strides = [1, 1]} : vector<8x384xf32> to vector<8x128xf32>
    %100 = vector.extract_strided_slice %97 {offsets = [0, 256], sizes = [8, 128], strides = [1, 1]} : vector<8x384xf32> to vector<8x128xf32>
    %101 = vector.extract_strided_slice %89 {offsets = [0, 384], sizes = [8, 128], strides = [1, 1]} : vector<8x512xf32> to vector<8x128xf32>
    %102 = math.tanh %101 : vector<8x128xf32>
    %103 = arith.mulf %99, %60 : vector<8x128xf32>
    %104 = arith.mulf %98, %102 : vector<8x128xf32>
    %105 = arith.addf %103, %104 : vector<8x128xf32>
    %106 = math.tanh %105 : vector<8x128xf32>
    %107 = arith.mulf %100, %106 : vector<8x128xf32>
    %108 = vector.extract_strided_slice %16 {offsets = [2, 0, 0], sizes = [1, 8, 512], strides = [1, 1, 1]} : vector<8x8x512xf32> to vector<1x8x512xf32>
    %109 = vector.shape_cast %108 : vector<1x8x512xf32> to vector<8x512xf32>
    %110 = arith.truncf %85 : vector<8x128xf32> to vector<8x128xbf16>
    %cst_32 = arith.constant dense<0.000000e+00> : vector<8x512xf32>
    %111 = tpu.matmul %110, %2, %cst_32 {dimension_numbers = #tpu.dot_dimension_numbers<[1], [0], [0], [1], [0, 0, 1, 1], [], []>} : vector<8x128xbf16>, vector<128x512xbf16>, vector<8x512xf32> -> vector<8x512xf32>
    %112 = arith.addf %109, %111 : vector<8x512xf32>
    %113 = vector.extract_strided_slice %112 {offsets = [0, 0], sizes = [8, 384], strides = [1, 1]} : vector<8x512xf32> to vector<8x384xf32>
    %cst_33 = arith.constant 5.000000e-01 : f32
    %114 = vector.broadcast %cst_33 : f32 to vector<8x384xf32>
    %115 = arith.mulf %114, %113 : vector<8x384xf32>
    %116 = math.tanh %115 : vector<8x384xf32>
    %cst_34 = arith.constant 1.000000e+00 : f32
    %117 = vector.broadcast %cst_34 : f32 to vector<8x384xf32>
    %118 = arith.addf %117, %116 : vector<8x384xf32>
    %cst_35 = arith.constant 5.000000e-01 : f32
    %119 = vector.broadcast %cst_35 : f32 to vector<8x384xf32>
    %120 = arith.mulf %119, %118 : vector<8x384xf32>
    %121 = vector.extract_strided_slice %120 {offsets = [0, 0], sizes = [8, 128], strides = [1, 1]} : vector<8x384xf32> to vector<8x128xf32>
    %122 = vector.extract_strided_slice %120 {offsets = [0, 128], sizes = [8, 128], strides = [1, 1]} : vector<8x384xf32> to vector<8x128xf32>
    %123 = vector.extract_strided_slice %120 {offsets = [0, 256], sizes = [8, 128], strides = [1, 1]} : vector<8x384xf32> to vector<8x128xf32>
    %124 = vector.extract_strided_slice %112 {offsets = [0, 384], sizes = [8, 128], strides = [1, 1]} : vector<8x512xf32> to vector<8x128xf32>
    %125 = math.tanh %124 : vector<8x128xf32>
    %126 = arith.mulf %122, %83 : vector<8x128xf32>
    %127 = arith.mulf %121, %125 : vector<8x128xf32>
    %128 = arith.addf %126, %127 : vector<8x128xf32>
    %129 = math.tanh %128 : vector<8x128xf32>
    %130 = arith.mulf %123, %129 : vector<8x128xf32>
    %131 = tpu.concatenate %130, %107 in 1 : vector<8x128xf32>, vector<8x128xf32> -> vector<8x256xf32>
    %132 = arith.truncf %131 : vector<8x256xf32> to vector<8x256xbf16>
    %cst_36 = arith.constant dense<0.000000e+00> : vector<8x512xf32>
    %133 = tpu.matmul %132, %3, %cst_36 {dimension_numbers = #tpu.dot_dimension_numbers<[1], [0], [0], [1], [0, 0, 1, 1], [], []>} : vector<8x256xbf16>, vector<256x512xbf16>, vector<8x512xf32> -> vector<8x512xf32>
    %134 = arith.addf %133, %6 : vector<8x512xf32>
    %135 = vector.extract_strided_slice %134 {offsets = [0, 0], sizes = [8, 384], strides = [1, 1]} : vector<8x512xf32> to vector<8x384xf32>
    %cst_37 = arith.constant 5.000000e-01 : f32
    %136 = vector.broadcast %cst_37 : f32 to vector<8x384xf32>
    %137 = arith.mulf %136, %135 : vector<8x384xf32>
    %138 = math.tanh %137 : vector<8x384xf32>
    %cst_38 = arith.constant 1.000000e+00 : f32
    %139 = vector.broadcast %cst_38 : f32 to vector<8x384xf32>
    %140 = arith.addf %139, %138 : vector<8x384xf32>
    %cst_39 = arith.constant 5.000000e-01 : f32
    %141 = vector.broadcast %cst_39 : f32 to vector<8x384xf32>
    %142 = arith.mulf %141, %140 : vector<8x384xf32>
    %143 = vector.extract_strided_slice %142 {offsets = [0, 0], sizes = [8, 128], strides = [1, 1]} : vector<8x384xf32> to vector<8x128xf32>
    %144 = vector.extract_strided_slice %142 {offsets = [0, 128], sizes = [8, 128], strides = [1, 1]} : vector<8x384xf32> to vector<8x128xf32>
    %145 = vector.extract_strided_slice %142 {offsets = [0, 256], sizes = [8, 128], strides = [1, 1]} : vector<8x384xf32> to vector<8x128xf32>
    %146 = vector.extract_strided_slice %134 {offsets = [0, 384], sizes = [8, 128], strides = [1, 1]} : vector<8x512xf32> to vector<8x128xf32>
    %147 = math.tanh %146 : vector<8x128xf32>
    %148 = arith.mulf %144, %105 : vector<8x128xf32>
    %149 = arith.mulf %143, %147 : vector<8x128xf32>
    %150 = arith.addf %148, %149 : vector<8x128xf32>
    %151 = math.tanh %150 : vector<8x128xf32>
    %152 = arith.mulf %145, %151 : vector<8x128xf32>
    %153 = vector.extract_strided_slice %16 {offsets = [3, 0, 0], sizes = [1, 8, 512], strides = [1, 1, 1]} : vector<8x8x512xf32> to vector<1x8x512xf32>
    %154 = vector.shape_cast %153 : vector<1x8x512xf32> to vector<8x512xf32>
    %155 = arith.truncf %130 : vector<8x128xf32> to vector<8x128xbf16>
    %cst_40 = arith.constant dense<0.000000e+00> : vector<8x512xf32>
    %156 = tpu.matmul %155, %2, %cst_40 {dimension_numbers = #tpu.dot_dimension_numbers<[1], [0], [0], [1], [0, 0, 1, 1], [], []>} : vector<8x128xbf16>, vector<128x512xbf16>, vector<8x512xf32> -> vector<8x512xf32>
    %157 = arith.addf %154, %156 : vector<8x512xf32>
    %158 = vector.extract_strided_slice %157 {offsets = [0, 0], sizes = [8, 384], strides = [1, 1]} : vector<8x512xf32> to vector<8x384xf32>
    %cst_41 = arith.constant 5.000000e-01 : f32
    %159 = vector.broadcast %cst_41 : f32 to vector<8x384xf32>
    %160 = arith.mulf %159, %158 : vector<8x384xf32>
    %161 = math.tanh %160 : vector<8x384xf32>
    %cst_42 = arith.constant 1.000000e+00 : f32
    %162 = vector.broadcast %cst_42 : f32 to vector<8x384xf32>
    %163 = arith.addf %162, %161 : vector<8x384xf32>
    %cst_43 = arith.constant 5.000000e-01 : f32
    %164 = vector.broadcast %cst_43 : f32 to vector<8x384xf32>
    %165 = arith.mulf %164, %163 : vector<8x384xf32>
    %166 = vector.extract_strided_slice %165 {offsets = [0, 0], sizes = [8, 128], strides = [1, 1]} : vector<8x384xf32> to vector<8x128xf32>
    %167 = vector.extract_strided_slice %165 {offsets = [0, 128], sizes = [8, 128], strides = [1, 1]} : vector<8x384xf32> to vector<8x128xf32>
    %168 = vector.extract_strided_slice %165 {offsets = [0, 256], sizes = [8, 128], strides = [1, 1]} : vector<8x384xf32> to vector<8x128xf32>
    %169 = vector.extract_strided_slice %157 {offsets = [0, 384], sizes = [8, 128], strides = [1, 1]} : vector<8x512xf32> to vector<8x128xf32>
    %170 = math.tanh %169 : vector<8x128xf32>
    %171 = arith.mulf %167, %128 : vector<8x128xf32>
    %172 = arith.mulf %166, %170 : vector<8x128xf32>
    %173 = arith.addf %171, %172 : vector<8x128xf32>
    %174 = math.tanh %173 : vector<8x128xf32>
    %175 = arith.mulf %168, %174 : vector<8x128xf32>
    %176 = tpu.concatenate %175, %152 in 1 : vector<8x128xf32>, vector<8x128xf32> -> vector<8x256xf32>
    %177 = arith.truncf %176 : vector<8x256xf32> to vector<8x256xbf16>
    %cst_44 = arith.constant dense<0.000000e+00> : vector<8x512xf32>
    %178 = tpu.matmul %177, %3, %cst_44 {dimension_numbers = #tpu.dot_dimension_numbers<[1], [0], [0], [1], [0, 0, 1, 1], [], []>} : vector<8x256xbf16>, vector<256x512xbf16>, vector<8x512xf32> -> vector<8x512xf32>
    %179 = arith.addf %178, %6 : vector<8x512xf32>
    %180 = vector.extract_strided_slice %179 {offsets = [0, 0], sizes = [8, 384], strides = [1, 1]} : vector<8x512xf32> to vector<8x384xf32>
    %cst_45 = arith.constant 5.000000e-01 : f32
    %181 = vector.broadcast %cst_45 : f32 to vector<8x384xf32>
    %182 = arith.mulf %181, %180 : vector<8x384xf32>
    %183 = math.tanh %182 : vector<8x384xf32>
    %cst_46 = arith.constant 1.000000e+00 : f32
    %184 = vector.broadcast %cst_46 : f32 to vector<8x384xf32>
    %185 = arith.addf %184, %183 : vector<8x384xf32>
    %cst_47 = arith.constant 5.000000e-01 : f32
    %186 = vector.broadcast %cst_47 : f32 to vector<8x384xf32>
    %187 = arith.mulf %186, %185 : vector<8x384xf32>
    %188 = vector.extract_strided_slice %187 {offsets = [0, 0], sizes = [8, 128], strides = [1, 1]} : vector<8x384xf32> to vector<8x128xf32>
    %189 = vector.extract_strided_slice %187 {offsets = [0, 128], sizes = [8, 128], strides = [1, 1]} : vector<8x384xf32> to vector<8x128xf32>
    %190 = vector.extract_strided_slice %187 {offsets = [0, 256], sizes = [8, 128], strides = [1, 1]} : vector<8x384xf32> to vector<8x128xf32>
    %191 = vector.extract_strided_slice %179 {offsets = [0, 384], sizes = [8, 128], strides = [1, 1]} : vector<8x512xf32> to vector<8x128xf32>
    %192 = math.tanh %191 : vector<8x128xf32>
    %193 = arith.mulf %189, %150 : vector<8x128xf32>
    %194 = arith.mulf %188, %192 : vector<8x128xf32>
    %195 = arith.addf %193, %194 : vector<8x128xf32>
    %196 = math.tanh %195 : vector<8x128xf32>
    %197 = arith.mulf %190, %196 : vector<8x128xf32>
    %198 = vector.extract_strided_slice %16 {offsets = [4, 0, 0], sizes = [1, 8, 512], strides = [1, 1, 1]} : vector<8x8x512xf32> to vector<1x8x512xf32>
    %199 = vector.shape_cast %198 : vector<1x8x512xf32> to vector<8x512xf32>
    %200 = arith.truncf %175 : vector<8x128xf32> to vector<8x128xbf16>
    %cst_48 = arith.constant dense<0.000000e+00> : vector<8x512xf32>
    %201 = tpu.matmul %200, %2, %cst_48 {dimension_numbers = #tpu.dot_dimension_numbers<[1], [0], [0], [1], [0, 0, 1, 1], [], []>} : vector<8x128xbf16>, vector<128x512xbf16>, vector<8x512xf32> -> vector<8x512xf32>
    %202 = arith.addf %199, %201 : vector<8x512xf32>
    %203 = vector.extract_strided_slice %202 {offsets = [0, 0], sizes = [8, 384], strides = [1, 1]} : vector<8x512xf32> to vector<8x384xf32>
    %cst_49 = arith.constant 5.000000e-01 : f32
    %204 = vector.broadcast %cst_49 : f32 to vector<8x384xf32>
    %205 = arith.mulf %204, %203 : vector<8x384xf32>
    %206 = math.tanh %205 : vector<8x384xf32>
    %cst_50 = arith.constant 1.000000e+00 : f32
    %207 = vector.broadcast %cst_50 : f32 to vector<8x384xf32>
    %208 = arith.addf %207, %206 : vector<8x384xf32>
    %cst_51 = arith.constant 5.000000e-01 : f32
    %209 = vector.broadcast %cst_51 : f32 to vector<8x384xf32>
    %210 = arith.mulf %209, %208 : vector<8x384xf32>
    %211 = vector.extract_strided_slice %210 {offsets = [0, 0], sizes = [8, 128], strides = [1, 1]} : vector<8x384xf32> to vector<8x128xf32>
    %212 = vector.extract_strided_slice %210 {offsets = [0, 128], sizes = [8, 128], strides = [1, 1]} : vector<8x384xf32> to vector<8x128xf32>
    %213 = vector.extract_strided_slice %210 {offsets = [0, 256], sizes = [8, 128], strides = [1, 1]} : vector<8x384xf32> to vector<8x128xf32>
    %214 = vector.extract_strided_slice %202 {offsets = [0, 384], sizes = [8, 128], strides = [1, 1]} : vector<8x512xf32> to vector<8x128xf32>
    %215 = math.tanh %214 : vector<8x128xf32>
    %216 = arith.mulf %212, %173 : vector<8x128xf32>
    %217 = arith.mulf %211, %215 : vector<8x128xf32>
    %218 = arith.addf %216, %217 : vector<8x128xf32>
    %219 = math.tanh %218 : vector<8x128xf32>
    %220 = arith.mulf %213, %219 : vector<8x128xf32>
    %221 = tpu.concatenate %220, %197 in 1 : vector<8x128xf32>, vector<8x128xf32> -> vector<8x256xf32>
    %222 = arith.truncf %221 : vector<8x256xf32> to vector<8x256xbf16>
    %cst_52 = arith.constant dense<0.000000e+00> : vector<8x512xf32>
    %223 = tpu.matmul %222, %3, %cst_52 {dimension_numbers = #tpu.dot_dimension_numbers<[1], [0], [0], [1], [0, 0, 1, 1], [], []>} : vector<8x256xbf16>, vector<256x512xbf16>, vector<8x512xf32> -> vector<8x512xf32>
    %224 = arith.addf %223, %6 : vector<8x512xf32>
    %225 = vector.extract_strided_slice %224 {offsets = [0, 0], sizes = [8, 384], strides = [1, 1]} : vector<8x512xf32> to vector<8x384xf32>
    %cst_53 = arith.constant 5.000000e-01 : f32
    %226 = vector.broadcast %cst_53 : f32 to vector<8x384xf32>
    %227 = arith.mulf %226, %225 : vector<8x384xf32>
    %228 = math.tanh %227 : vector<8x384xf32>
    %cst_54 = arith.constant 1.000000e+00 : f32
    %229 = vector.broadcast %cst_54 : f32 to vector<8x384xf32>
    %230 = arith.addf %229, %228 : vector<8x384xf32>
    %cst_55 = arith.constant 5.000000e-01 : f32
    %231 = vector.broadcast %cst_55 : f32 to vector<8x384xf32>
    %232 = arith.mulf %231, %230 : vector<8x384xf32>
    %233 = vector.extract_strided_slice %232 {offsets = [0, 0], sizes = [8, 128], strides = [1, 1]} : vector<8x384xf32> to vector<8x128xf32>
    %234 = vector.extract_strided_slice %232 {offsets = [0, 128], sizes = [8, 128], strides = [1, 1]} : vector<8x384xf32> to vector<8x128xf32>
    %235 = vector.extract_strided_slice %232 {offsets = [0, 256], sizes = [8, 128], strides = [1, 1]} : vector<8x384xf32> to vector<8x128xf32>
    %236 = vector.extract_strided_slice %224 {offsets = [0, 384], sizes = [8, 128], strides = [1, 1]} : vector<8x512xf32> to vector<8x128xf32>
    %237 = math.tanh %236 : vector<8x128xf32>
    %238 = arith.mulf %234, %195 : vector<8x128xf32>
    %239 = arith.mulf %233, %237 : vector<8x128xf32>
    %240 = arith.addf %238, %239 : vector<8x128xf32>
    %241 = math.tanh %240 : vector<8x128xf32>
    %242 = arith.mulf %235, %241 : vector<8x128xf32>
    %243 = vector.extract_strided_slice %16 {offsets = [5, 0, 0], sizes = [1, 8, 512], strides = [1, 1, 1]} : vector<8x8x512xf32> to vector<1x8x512xf32>
    %244 = vector.shape_cast %243 : vector<1x8x512xf32> to vector<8x512xf32>
    %245 = arith.truncf %220 : vector<8x128xf32> to vector<8x128xbf16>
    %cst_56 = arith.constant dense<0.000000e+00> : vector<8x512xf32>
    %246 = tpu.matmul %245, %2, %cst_56 {dimension_numbers = #tpu.dot_dimension_numbers<[1], [0], [0], [1], [0, 0, 1, 1], [], []>} : vector<8x128xbf16>, vector<128x512xbf16>, vector<8x512xf32> -> vector<8x512xf32>
    %247 = arith.addf %244, %246 : vector<8x512xf32>
    %248 = vector.extract_strided_slice %247 {offsets = [0, 0], sizes = [8, 384], strides = [1, 1]} : vector<8x512xf32> to vector<8x384xf32>
    %cst_57 = arith.constant 5.000000e-01 : f32
    %249 = vector.broadcast %cst_57 : f32 to vector<8x384xf32>
    %250 = arith.mulf %249, %248 : vector<8x384xf32>
    %251 = math.tanh %250 : vector<8x384xf32>
    %cst_58 = arith.constant 1.000000e+00 : f32
    %252 = vector.broadcast %cst_58 : f32 to vector<8x384xf32>
    %253 = arith.addf %252, %251 : vector<8x384xf32>
    %cst_59 = arith.constant 5.000000e-01 : f32
    %254 = vector.broadcast %cst_59 : f32 to vector<8x384xf32>
    %255 = arith.mulf %254, %253 : vector<8x384xf32>
    %256 = vector.extract_strided_slice %255 {offsets = [0, 0], sizes = [8, 128], strides = [1, 1]} : vector<8x384xf32> to vector<8x128xf32>
    %257 = vector.extract_strided_slice %255 {offsets = [0, 128], sizes = [8, 128], strides = [1, 1]} : vector<8x384xf32> to vector<8x128xf32>
    %258 = vector.extract_strided_slice %255 {offsets = [0, 256], sizes = [8, 128], strides = [1, 1]} : vector<8x384xf32> to vector<8x128xf32>
    %259 = vector.extract_strided_slice %247 {offsets = [0, 384], sizes = [8, 128], strides = [1, 1]} : vector<8x512xf32> to vector<8x128xf32>
    %260 = math.tanh %259 : vector<8x128xf32>
    %261 = arith.mulf %257, %218 : vector<8x128xf32>
    %262 = arith.mulf %256, %260 : vector<8x128xf32>
    %263 = arith.addf %261, %262 : vector<8x128xf32>
    %264 = math.tanh %263 : vector<8x128xf32>
    %265 = arith.mulf %258, %264 : vector<8x128xf32>
    %266 = tpu.concatenate %265, %242 in 1 : vector<8x128xf32>, vector<8x128xf32> -> vector<8x256xf32>
    %267 = arith.truncf %266 : vector<8x256xf32> to vector<8x256xbf16>
    %cst_60 = arith.constant dense<0.000000e+00> : vector<8x512xf32>
    %268 = tpu.matmul %267, %3, %cst_60 {dimension_numbers = #tpu.dot_dimension_numbers<[1], [0], [0], [1], [0, 0, 1, 1], [], []>} : vector<8x256xbf16>, vector<256x512xbf16>, vector<8x512xf32> -> vector<8x512xf32>
    %269 = arith.addf %268, %6 : vector<8x512xf32>
    %270 = vector.extract_strided_slice %269 {offsets = [0, 0], sizes = [8, 384], strides = [1, 1]} : vector<8x512xf32> to vector<8x384xf32>
    %cst_61 = arith.constant 5.000000e-01 : f32
    %271 = vector.broadcast %cst_61 : f32 to vector<8x384xf32>
    %272 = arith.mulf %271, %270 : vector<8x384xf32>
    %273 = math.tanh %272 : vector<8x384xf32>
    %cst_62 = arith.constant 1.000000e+00 : f32
    %274 = vector.broadcast %cst_62 : f32 to vector<8x384xf32>
    %275 = arith.addf %274, %273 : vector<8x384xf32>
    %cst_63 = arith.constant 5.000000e-01 : f32
    %276 = vector.broadcast %cst_63 : f32 to vector<8x384xf32>
    %277 = arith.mulf %276, %275 : vector<8x384xf32>
    %278 = vector.extract_strided_slice %277 {offsets = [0, 0], sizes = [8, 128], strides = [1, 1]} : vector<8x384xf32> to vector<8x128xf32>
    %279 = vector.extract_strided_slice %277 {offsets = [0, 128], sizes = [8, 128], strides = [1, 1]} : vector<8x384xf32> to vector<8x128xf32>
    %280 = vector.extract_strided_slice %277 {offsets = [0, 256], sizes = [8, 128], strides = [1, 1]} : vector<8x384xf32> to vector<8x128xf32>
    %281 = vector.extract_strided_slice %269 {offsets = [0, 384], sizes = [8, 128], strides = [1, 1]} : vector<8x512xf32> to vector<8x128xf32>
    %282 = math.tanh %281 : vector<8x128xf32>
    %283 = arith.mulf %279, %240 : vector<8x128xf32>
    %284 = arith.mulf %278, %282 : vector<8x128xf32>
    %285 = arith.addf %283, %284 : vector<8x128xf32>
    %286 = math.tanh %285 : vector<8x128xf32>
    %287 = arith.mulf %280, %286 : vector<8x128xf32>
    %288 = vector.extract_strided_slice %16 {offsets = [6, 0, 0], sizes = [1, 8, 512], strides = [1, 1, 1]} : vector<8x8x512xf32> to vector<1x8x512xf32>
    %289 = vector.shape_cast %288 : vector<1x8x512xf32> to vector<8x512xf32>
    %290 = arith.truncf %265 : vector<8x128xf32> to vector<8x128xbf16>
    %cst_64 = arith.constant dense<0.000000e+00> : vector<8x512xf32>
    %291 = tpu.matmul %290, %2, %cst_64 {dimension_numbers = #tpu.dot_dimension_numbers<[1], [0], [0], [1], [0, 0, 1, 1], [], []>} : vector<8x128xbf16>, vector<128x512xbf16>, vector<8x512xf32> -> vector<8x512xf32>
    %292 = arith.addf %289, %291 : vector<8x512xf32>
    %293 = vector.extract_strided_slice %292 {offsets = [0, 0], sizes = [8, 384], strides = [1, 1]} : vector<8x512xf32> to vector<8x384xf32>
    %cst_65 = arith.constant 5.000000e-01 : f32
    %294 = vector.broadcast %cst_65 : f32 to vector<8x384xf32>
    %295 = arith.mulf %294, %293 : vector<8x384xf32>
    %296 = math.tanh %295 : vector<8x384xf32>
    %cst_66 = arith.constant 1.000000e+00 : f32
    %297 = vector.broadcast %cst_66 : f32 to vector<8x384xf32>
    %298 = arith.addf %297, %296 : vector<8x384xf32>
    %cst_67 = arith.constant 5.000000e-01 : f32
    %299 = vector.broadcast %cst_67 : f32 to vector<8x384xf32>
    %300 = arith.mulf %299, %298 : vector<8x384xf32>
    %301 = vector.extract_strided_slice %300 {offsets = [0, 0], sizes = [8, 128], strides = [1, 1]} : vector<8x384xf32> to vector<8x128xf32>
    %302 = vector.extract_strided_slice %300 {offsets = [0, 128], sizes = [8, 128], strides = [1, 1]} : vector<8x384xf32> to vector<8x128xf32>
    %303 = vector.extract_strided_slice %300 {offsets = [0, 256], sizes = [8, 128], strides = [1, 1]} : vector<8x384xf32> to vector<8x128xf32>
    %304 = vector.extract_strided_slice %292 {offsets = [0, 384], sizes = [8, 128], strides = [1, 1]} : vector<8x512xf32> to vector<8x128xf32>
    %305 = math.tanh %304 : vector<8x128xf32>
    %306 = arith.mulf %302, %263 : vector<8x128xf32>
    %307 = arith.mulf %301, %305 : vector<8x128xf32>
    %308 = arith.addf %306, %307 : vector<8x128xf32>
    %309 = math.tanh %308 : vector<8x128xf32>
    %310 = arith.mulf %303, %309 : vector<8x128xf32>
    %311 = tpu.concatenate %310, %287 in 1 : vector<8x128xf32>, vector<8x128xf32> -> vector<8x256xf32>
    %312 = arith.truncf %311 : vector<8x256xf32> to vector<8x256xbf16>
    %cst_68 = arith.constant dense<0.000000e+00> : vector<8x512xf32>
    %313 = tpu.matmul %312, %3, %cst_68 {dimension_numbers = #tpu.dot_dimension_numbers<[1], [0], [0], [1], [0, 0, 1, 1], [], []>} : vector<8x256xbf16>, vector<256x512xbf16>, vector<8x512xf32> -> vector<8x512xf32>
    %314 = arith.addf %313, %6 : vector<8x512xf32>
    %315 = vector.extract_strided_slice %314 {offsets = [0, 0], sizes = [8, 384], strides = [1, 1]} : vector<8x512xf32> to vector<8x384xf32>
    %cst_69 = arith.constant 5.000000e-01 : f32
    %316 = vector.broadcast %cst_69 : f32 to vector<8x384xf32>
    %317 = arith.mulf %316, %315 : vector<8x384xf32>
    %318 = math.tanh %317 : vector<8x384xf32>
    %cst_70 = arith.constant 1.000000e+00 : f32
    %319 = vector.broadcast %cst_70 : f32 to vector<8x384xf32>
    %320 = arith.addf %319, %318 : vector<8x384xf32>
    %cst_71 = arith.constant 5.000000e-01 : f32
    %321 = vector.broadcast %cst_71 : f32 to vector<8x384xf32>
    %322 = arith.mulf %321, %320 : vector<8x384xf32>
    %323 = vector.extract_strided_slice %322 {offsets = [0, 0], sizes = [8, 128], strides = [1, 1]} : vector<8x384xf32> to vector<8x128xf32>
    %324 = vector.extract_strided_slice %322 {offsets = [0, 128], sizes = [8, 128], strides = [1, 1]} : vector<8x384xf32> to vector<8x128xf32>
    %325 = vector.extract_strided_slice %322 {offsets = [0, 256], sizes = [8, 128], strides = [1, 1]} : vector<8x384xf32> to vector<8x128xf32>
    %326 = vector.extract_strided_slice %314 {offsets = [0, 384], sizes = [8, 128], strides = [1, 1]} : vector<8x512xf32> to vector<8x128xf32>
    %327 = math.tanh %326 : vector<8x128xf32>
    %328 = arith.mulf %324, %285 : vector<8x128xf32>
    %329 = arith.mulf %323, %327 : vector<8x128xf32>
    %330 = arith.addf %328, %329 : vector<8x128xf32>
    %331 = math.tanh %330 : vector<8x128xf32>
    %332 = arith.mulf %325, %331 : vector<8x128xf32>
    %333 = vector.extract_strided_slice %16 {offsets = [7, 0, 0], sizes = [1, 8, 512], strides = [1, 1, 1]} : vector<8x8x512xf32> to vector<1x8x512xf32>
    %334 = vector.shape_cast %333 : vector<1x8x512xf32> to vector<8x512xf32>
    %335 = arith.truncf %310 : vector<8x128xf32> to vector<8x128xbf16>
    %cst_72 = arith.constant dense<0.000000e+00> : vector<8x512xf32>
    %336 = tpu.matmul %335, %2, %cst_72 {dimension_numbers = #tpu.dot_dimension_numbers<[1], [0], [0], [1], [0, 0, 1, 1], [], []>} : vector<8x128xbf16>, vector<128x512xbf16>, vector<8x512xf32> -> vector<8x512xf32>
    %337 = arith.addf %334, %336 : vector<8x512xf32>
    %338 = vector.extract_strided_slice %337 {offsets = [0, 0], sizes = [8, 384], strides = [1, 1]} : vector<8x512xf32> to vector<8x384xf32>
    %cst_73 = arith.constant 5.000000e-01 : f32
    %339 = vector.broadcast %cst_73 : f32 to vector<8x384xf32>
    %340 = arith.mulf %339, %338 : vector<8x384xf32>
    %341 = math.tanh %340 : vector<8x384xf32>
    %cst_74 = arith.constant 1.000000e+00 : f32
    %342 = vector.broadcast %cst_74 : f32 to vector<8x384xf32>
    %343 = arith.addf %342, %341 : vector<8x384xf32>
    %cst_75 = arith.constant 5.000000e-01 : f32
    %344 = vector.broadcast %cst_75 : f32 to vector<8x384xf32>
    %345 = arith.mulf %344, %343 : vector<8x384xf32>
    %346 = vector.extract_strided_slice %345 {offsets = [0, 0], sizes = [8, 128], strides = [1, 1]} : vector<8x384xf32> to vector<8x128xf32>
    %347 = vector.extract_strided_slice %345 {offsets = [0, 128], sizes = [8, 128], strides = [1, 1]} : vector<8x384xf32> to vector<8x128xf32>
    %348 = vector.extract_strided_slice %345 {offsets = [0, 256], sizes = [8, 128], strides = [1, 1]} : vector<8x384xf32> to vector<8x128xf32>
    %349 = vector.extract_strided_slice %337 {offsets = [0, 384], sizes = [8, 128], strides = [1, 1]} : vector<8x512xf32> to vector<8x128xf32>
    %350 = math.tanh %349 : vector<8x128xf32>
    %351 = arith.mulf %347, %308 : vector<8x128xf32>
    %352 = arith.mulf %346, %350 : vector<8x128xf32>
    %353 = arith.addf %351, %352 : vector<8x128xf32>
    %354 = math.tanh %353 : vector<8x128xf32>
    %355 = arith.mulf %348, %354 : vector<8x128xf32>
    %356 = tpu.concatenate %355, %332 in 1 : vector<8x128xf32>, vector<8x128xf32> -> vector<8x256xf32>
    %357 = arith.truncf %356 : vector<8x256xf32> to vector<8x256xbf16>
    %cst_76 = arith.constant dense<0.000000e+00> : vector<8x512xf32>
    %358 = tpu.matmul %357, %3, %cst_76 {dimension_numbers = #tpu.dot_dimension_numbers<[1], [0], [0], [1], [0, 0, 1, 1], [], []>} : vector<8x256xbf16>, vector<256x512xbf16>, vector<8x512xf32> -> vector<8x512xf32>
    %359 = arith.addf %358, %6 : vector<8x512xf32>
    %360 = vector.extract_strided_slice %359 {offsets = [0, 0], sizes = [8, 384], strides = [1, 1]} : vector<8x512xf32> to vector<8x384xf32>
    %cst_77 = arith.constant 5.000000e-01 : f32
    %361 = vector.broadcast %cst_77 : f32 to vector<8x384xf32>
    %362 = arith.mulf %361, %360 : vector<8x384xf32>
    %363 = math.tanh %362 : vector<8x384xf32>
    %cst_78 = arith.constant 1.000000e+00 : f32
    %364 = vector.broadcast %cst_78 : f32 to vector<8x384xf32>
    %365 = arith.addf %364, %363 : vector<8x384xf32>
    %cst_79 = arith.constant 5.000000e-01 : f32
    %366 = vector.broadcast %cst_79 : f32 to vector<8x384xf32>
    %367 = arith.mulf %366, %365 : vector<8x384xf32>
    %368 = vector.extract_strided_slice %367 {offsets = [0, 0], sizes = [8, 128], strides = [1, 1]} : vector<8x384xf32> to vector<8x128xf32>
    %369 = vector.extract_strided_slice %367 {offsets = [0, 128], sizes = [8, 128], strides = [1, 1]} : vector<8x384xf32> to vector<8x128xf32>
    %370 = vector.extract_strided_slice %367 {offsets = [0, 256], sizes = [8, 128], strides = [1, 1]} : vector<8x384xf32> to vector<8x128xf32>
    %371 = vector.extract_strided_slice %359 {offsets = [0, 384], sizes = [8, 128], strides = [1, 1]} : vector<8x512xf32> to vector<8x128xf32>
    %372 = math.tanh %371 : vector<8x128xf32>
    %373 = arith.mulf %369, %330 : vector<8x128xf32>
    %374 = arith.mulf %368, %372 : vector<8x128xf32>
    %375 = arith.addf %373, %374 : vector<8x128xf32>
    %376 = math.tanh %375 : vector<8x128xf32>
    %377 = arith.mulf %370, %376 : vector<8x128xf32>
    %378 = vector.broadcast %7 : vector<1x128xf32> to vector<8x128xf32>
    %379 = arith.mulf %377, %378 : vector<8x128xf32>
    %cst_80 = arith.constant dense<0.000000e+00> : vector<8xf32>
    %380 = vector.multi_reduction <add>, %379, %cst_80 [1] : vector<8x128xf32> to vector<8xf32>
    %381 = vector.shape_cast %380 : vector<8xf32> to vector<8x1xf32>
    %382 = vector.broadcast %8 : vector<1x1xf32> to vector<8x1xf32>
    %383 = arith.addf %381, %382 : vector<8x1xf32>
    %c0_81 = arith.constant 0 : index
    %c0_82 = arith.constant 0 : index
    %384 = vector.load %arg9[%c0_81, %c0_82] : memref<8x1xf32, #tpu.memory_space<vmem>>, vector<8x1xf32>
    tpu.vector_store %arg9[%c0_81, %c0_82], %383 {strides = array<i32>} : memref<8x1xf32, #tpu.memory_space<vmem>>, vector<8x1xf32>,
    return
  }
  func.func @transform_0(%arg0: i32) -> (i32, i32, i32) {
    %c0_i32 = arith.constant 0 : i32
    %c0_i32_0 = arith.constant 0 : i32
    %c0_i32_1 = arith.constant 0 : i32
    %c0_i32_2 = arith.constant 0 : i32
    return %c0_i32, %c0_i32_0, %c0_i32_1 : i32, i32, i32
  }
  func.func @transform_1(%arg0: i32) -> (i32, i32) {
    %c0_i32 = arith.constant 0 : i32
    %c0_i32_0 = arith.constant 0 : i32
    %c0_i32_1 = arith.constant 0 : i32
    return %c0_i32, %c0_i32_0 : i32, i32
  }
  func.func @transform_2(%arg0: i32) -> (i32, i32) {
    %c0_i32 = arith.constant 0 : i32
    %c0_i32_0 = arith.constant 0 : i32
    %c0_i32_1 = arith.constant 0 : i32
    return %c0_i32, %c0_i32_0 : i32, i32
  }
  func.func @transform_3(%arg0: i32) -> (i32, i32) {
    %c0_i32 = arith.constant 0 : i32
    %c0_i32_0 = arith.constant 0 : i32
    %c0_i32_1 = arith.constant 0 : i32
    return %c0_i32, %c0_i32_0 : i32, i32
  }
  func.func @transform_4(%arg0: i32) -> (i32, i32) {
    %c0_i32 = arith.constant 0 : i32
    %c0_i32_0 = arith.constant 0 : i32
    %c0_i32_1 = arith.constant 0 : i32
    return %c0_i32, %c0_i32_0 : i32, i32
  }
  func.func @transform_5(%arg0: i32) -> (i32, i32) {
    %c0_i32 = arith.constant 0 : i32
    %c0_i32_0 = arith.constant 0 : i32
    %c0_i32_1 = arith.constant 0 : i32
    return %c0_i32, %c0_i32_0 : i32, i32
  }
  func.func @transform_6(%arg0: i32) -> (i32, i32) {
    %c0_i32 = arith.constant 0 : i32
    %c0_i32_0 = arith.constant 0 : i32
    %c0_i32_1 = arith.constant 0 : i32
    return %c0_i32, %c0_i32_0 : i32, i32
  }
  func.func @transform_7(%arg0: i32) -> (i32, i32) {
    %c0_i32 = arith.constant 0 : i32
    %c0_i32_0 = arith.constant 0 : i32
    %c0_i32_1 = arith.constant 0 : i32
    return %c0_i32, %c0_i32_0 : i32, i32
  }
  func.func @transform_8(%arg0: i32) -> (i32, i32) {
    %c0_i32 = arith.constant 0 : i32
    %c0_i32_0 = arith.constant 0 : i32
    %c0_i32_1 = arith.constant 0 : i32
    return %c0_i32, %c0_i32_0 : i32, i32
  }
}

</mosaic_0001>

<llo_original>
// kernel: lstm_model_forward.1
$region0: #{lstm_model_forward.1}
  #allocation0 [shape = 'u32[]', space=smem, size = 0x4, offset = 0x4, fixed_abs, tag = 'smem constant byte address 0x4 - core index']
  #allocation1 [shape = 'u32[72,128]{1,0:T(1,128)}', space=vmem, size = 0x9000, scoped, tag = 'internal scratch']
  #allocation2 [shape = 'f32[1,1]{1,0:T(1,128)S(1)}', space=vmem, size = 0x200, scoped, tag = 'scoped memory for lstm_model_forward.1']
  %s0 = inlined_call_operand.vmem [shape: f32[8,8,1], index: 0, kind: input, shape index: {}]
  %s1 = inlined_call_operand.vmem [shape: f32[1,512], index: 1, kind: input, shape index: {}]
  %s2 = inlined_call_operand.vmem [shape: f32[1,512], index: 2, kind: input, shape index: {}]
  %s3 = inlined_call_operand.hbm [shape: bf16[128,512], index: 3, kind: input, shape index: {}]
  %s4 = inlined_call_operand.hbm [shape: bf16[256,512], index: 4, kind: input, shape index: {}]
  %s5 = inlined_call_operand.vmem [shape: f32[1,512], index: 5, kind: input, shape index: {}]
  %s6 = inlined_call_operand.vmem [shape: f32[1,128], index: 6, kind: input, shape index: {}]
  %s7 = inlined_call_operand.<no memory space> [shape: f32[1,1], index: 7, kind: input, shape index: {}]
  %s8 = inlined_call_operand.vmem [shape: f32[8,1], index: 8, kind: output, shape index: {}]
  %s9 = sld [smem:[#allocation0]]
  $region50: #{lstm_model_forward.1} parent=0
    _
  %s11 = ssub.s32 1, %s9
  %s12 = scalar_select 0, %s11, %s9
  %v13 = vstv %s7
  %14 = vst [vmem:[#allocation2] sm:$0x1] %v13
  $region1: #{lstm_model_forward.1} parent=0
    #allocation3 [shape = 'u8[131072]{0}', space=vmem, size = 0x20000, scoped, tag = 'input window, operand 3, single buffered']
    #allocation4 [shape = 's32[1]{0}', space=sflag, size = 0x4, scoped, tag = 'scoped memory for lstm_model_forward.1']
    #allocation5 [shape = 'u8[262144]{0}', space=vmem, size = 0x40000, scoped, tag = 'input window, operand 4, single buffered']
    #allocation6 [shape = 's32[1]{0}', space=sflag, size = 0x4, scoped, tag = 'scoped memory for lstm_model_forward.1']
    %15 = vsyncpa [#allocation4], 0
    %16 = vsyncpa [#allocation6], 0
    // Predicated region
    $region2: #{lstm_model_forward.1} parent=1 // pred_check
      _
    $region3: #{lstm_model_forward.1} parent=1 // pred_check_branch
      %18 = sbr.rel (0) target = $region5
    $region4: #{lstm_model_forward.1} parent=1 // pred_region
      _
    $region5: #{lstm_model_forward.1} parent=1 // pred_fallthru
      _
    // Predicated region
    $region6: #{lstm_model_forward.1} parent=1 // pred_check
      _
    $region7: #{lstm_model_forward.1} parent=1 // pred_check_branch
      %20 = sbr.rel (0) target = $region9
    $region8: #{lstm_model_forward.1} parent=1 // pred_region
      _
    $region9: #{lstm_model_forward.1} parent=1 // pred_fallthru
      _
    // Predicated region
    $region10: #{lstm_model_forward.1} parent=1 // pred_check
      _
    $region11: #{lstm_model_forward.1} parent=1 // pred_check_branch
      %22 = sbr.rel (0) target = $region13
    $region12: #{lstm_model_forward.1} parent=1 // pred_region
      _
    $region13: #{lstm_model_forward.1} parent=1 // pred_fallthru
      _
    // Predicated region
    $region14: #{lstm_model_forward.1} parent=1 // pred_check
      _
    $region15: #{lstm_model_forward.1} parent=1 // pred_check_branch
      %24 = sbr.rel (0) target = $region17
    $region16: #{lstm_model_forward.1} parent=1 // pred_region
      %26 = vsyncadd [#allocation4], 0
      %s27 = sshll.u32 %s3, 4
      %s28 = int_to_ptr.hbm [resolvable:$true] %s27
      %s29 = sshll.u32 [#allocation3], 4
      %s30 = int_to_ptr.vmem [resolvable:$true] %s29
      %35 = dma.hbm_to_vmem [thread:$0]  %s28, 4096, %s30, [#allocation4], 256, 256, 16
    $region17: #{lstm_model_forward.1} parent=1 // pred_fallthru
      _
    // Predicated region
    $region18: #{lstm_model_forward.1} parent=1 // pred_check
      _
    $region19: #{lstm_model_forward.1} parent=1 // pred_check_branch
      %37 = sbr.rel (0) target = $region21
    $region20: #{lstm_model_forward.1} parent=1 // pred_region
      %39 = vsyncadd [#allocation6], 0
      %s40 = sshll.u32 %s4, 4
      %s41 = int_to_ptr.hbm [resolvable:$true] %s40
      %s42 = sshll.u32 [#allocation5], 4
      %s43 = int_to_ptr.vmem [resolvable:$true] %s42
      %48 = dma.hbm_to_vmem [thread:$0]  %s41, 8192, %s43, [#allocation6], 256, 256, 16
    $region21: #{lstm_model_forward.1} parent=1 // pred_fallthru
      _
    // Predicated region
    $region22: #{lstm_model_forward.1} parent=1 // pred_check
      _
    $region23: #{lstm_model_forward.1} parent=1 // pred_check_branch
      %50 = sbr.rel (0) target = $region25
    $region24: #{lstm_model_forward.1} parent=1 // pred_region
      _
    $region25: #{lstm_model_forward.1} parent=1 // pred_fallthru
      _
    // Predicated region
    $region26: #{lstm_model_forward.1} parent=1 // pred_check
      _
    $region27: #{lstm_model_forward.1} parent=1 // pred_check_branch
      %52 = sbr.rel (0) target = $region29
    $region28: #{lstm_model_forward.1} parent=1 // pred_region
      _
    $region29: #{lstm_model_forward.1} parent=1 // pred_fallthru
      _
    // Predicated region
    $region30: #{lstm_model_forward.1} parent=1 // pred_check
      _
    $region31: #{lstm_model_forward.1} parent=1 // pred_check_branch
      %54 = sbr.rel (0) target = $region33
    $region32: #{lstm_model_forward.1} parent=1 // pred_region
      _
    $region33: #{lstm_model_forward.1} parent=1 // pred_fallthru
      _
    // Predicated region
    $region34: #{lstm_model_forward.1} parent=1 // pred_check
      _
    $region35: #{lstm_model_forward.1} parent=1 // pred_check_branch
      %56 = sbr.rel (0) target = $region37
    $region36: #{lstm_model_forward.1} parent=1 // pred_region
      %58 = dma.done [#allocation4], 4096
    $region37: #{lstm_model_forward.1} parent=1 // pred_fallthru
      _
    // Predicated region
    $region38: #{lstm_model_forward.1} parent=1 // pred_check
      _
    $region39: #{lstm_model_forward.1} parent=1 // pred_check_branch
      %60 = sbr.rel (0) target = $region41
    $region40: #{lstm_model_forward.1} parent=1 // pred_region
      %62 = dma.done [#allocation6], 8192
    $region41: #{lstm_model_forward.1} parent=1 // pred_fallthru
      _
    %v64 = vld [vmem:[%s1] sm:$0xf]
    %v65 = vld [vmem:[%s2] sm:$0xf]
    %v66 = vld [vmem:[#allocation3] sm:$0xff]
    %v67 = vld [vmem:[#allocation3 + $0x8] sm:$0xff]
    %v68 = vld [vmem:[#allocation3 + $0x10] sm:$0xff]
    %v69 = vld [vmem:[#allocation3 + $0x18] sm:$0xff]
    %v70 = vld [vmem:[#allocation3 + $0x20] sm:$0xff]
    %v71 = vld [vmem:[#allocation3 + $0x28] sm:$0xff]
    %v72 = vld [vmem:[#allocation3 + $0x30] sm:$0xff]
    %v73 = vld [vmem:[#allocation3 + $0x38] sm:$0xff]
    %v74 = vld [vmem:[#allocation3 + $0x40] sm:$0xff]
    %v75 = vld [vmem:[#allocation3 + $0x48] sm:$0xff]
    %v76 = vld [vmem:[#allocation3 + $0x50] sm:$0xff]
    %v77 = vld [vmem:[#allocation3 + $0x58] sm:$0xff]
    %v78 = vld [vmem:[#allocation3 + $0x60] sm:$0xff]
    %v79 = vld [vmem:[#allocation3 + $0x68] sm:$0xff]
    %v80 = vld [vmem:[#allocation3 + $0x70] sm:$0xff]
    %v81 = vld [vmem:[#allocation3 + $0x78] sm:$0xff]
    %v82 = vld [vmem:[#allocation3 + $0x80] sm:$0xff]
    %v83 = vld [vmem:[#allocation3 + $0x88] sm:$0xff]
    %v84 = vld [vmem:[#allocation3 + $0x90] sm:$0xff]
    %v85 = vld [vmem:[#allocation3 + $0x98] sm:$0xff]
    %v86 = vld [vmem:[#allocation3 + $0xa0] sm:$0xff]
    %v87 = vld [vmem:[#allocation3 + $0xa8] sm:$0xff]
    %v88 = vld [vmem:[#allocation3 + $0xb0] sm:$0xff]
    %v89 = vld [vmem:[#allocation3 + $0xb8] sm:$0xff]
    %v90 = vld [vmem:[#allocation3 + $0xc0] sm:$0xff]
    %v91 = vld [vmem:[#allocation3 + $0xc8] sm:$0xff]
    %v92 = vld [vmem:[#allocation3 + $0xd0] sm:$0xff]
    %v93 = vld [vmem:[#allocation3 + $0xd8] sm:$0xff]
    %v94 = vld [vmem:[#allocation3 + $0xe0] sm:$0xff]
    %v95 = vld [vmem:[#allocation3 + $0xe8] sm:$0xff]
    %v96 = vld [vmem:[#allocation3 + $0xf0] sm:$0xff]
    %v97 = vld [vmem:[#allocation3 + $0xf8] sm:$0xff]
    %v98 = vld [vmem:[#allocation5] sm:$0xff]
    %v99 = vld [vmem:[#allocation5 + $0x8] sm:$0xff]
    %v100 = vld [vmem:[#allocation5 + $0x10] sm:$0xff]
    %v101 = vld [vmem:[#allocation5 + $0x18] sm:$0xff]
    %v102 = vld [vmem:[#allocation5 + $0x20] sm:$0xff]
    %v103 = vld [vmem:[#allocation5 + $0x28] sm:$0xff]
    %v104 = vld [vmem:[#allocation5 + $0x30] sm:$0xff]
    %v105 = vld [vmem:[#allocation5 + $0x38] sm:$0xff]
    %v106 = vld [vmem:[#allocation5 + $0x40] sm:$0xff]
    %v107 = vld [vmem:[#allocation5 + $0x48] sm:$0xff]
    %v108 = vld [vmem:[#allocation5 + $0x50] sm:$0xff]
    %v109 = vld [vmem:[#allocation5 + $0x58] sm:$0xff]
    %v110 = vld [vmem:[#allocation5 + $0x60] sm:$0xff]
    %v111 = vld [vmem:[#allocation5 + $0x68] sm:$0xff]
    %v112 = vld [vmem:[#allocation5 + $0x70] sm:$0xff]
    %v113 = vld [vmem:[#allocation5 + $0x78] sm:$0xff]
    %v114 = vld [vmem:[#allocation5 + $0x80] sm:$0xff]
    %v115 = vld [vmem:[#allocation5 + $0x88] sm:$0xff]
    %v116 = vld [vmem:[#allocation5 + $0x90] sm:$0xff]
    %v117 = vld [vmem:[#allocation5 + $0x98] sm:$0xff]
    %v118 = vld [vmem:[#allocation5 + $0xa0] sm:$0xff]
    %v119 = vld [vmem:[#allocation5 + $0xa8] sm:$0xff]
    %v120 = vld [vmem:[#allocation5 + $0xb0] sm:$0xff]
    %v121 = vld [vmem:[#allocation5 + $0xb8] sm:$0xff]
    %v122 = vld [vmem:[#allocation5 + $0xc0] sm:$0xff]
    %v123 = vld [vmem:[#allocation5 + $0xc8] sm:$0xff]
    %v124 = vld [vmem:[#allocation5 + $0xd0] sm:$0xff]
    %v125 = vld [vmem:[#allocation5 + $0xd8] sm:$0xff]
    %v126 = vld [vmem:[#allocation5 + $0xe0] sm:$0xff]
    %v127 = vld [vmem:[#allocation5 + $0xe8] sm:$0xff]
    %v128 = vld [vmem:[#allocation5 + $0xf0] sm:$0xff]
    %v129 = vld [vmem:[#allocation5 + $0xf8] sm:$0xff]
    %v130 = vld [vmem:[#allocation5 + $0x100] sm:$0xff]
    %v131 = vld [vmem:[#allocation5 + $0x108] sm:$0xff]
    %v132 = vld [vmem:[#allocation5 + $0x110] sm:$0xff]
    %v133 = vld [vmem:[#allocation5 + $0x118] sm:$0xff]
    %v134 = vld [vmem:[#allocation5 + $0x120] sm:$0xff]
    %v135 = vld [vmem:[#allocation5 + $0x128] sm:$0xff]
    %v136 = vld [vmem:[#allocation5 + $0x130] sm:$0xff]
    %v137 = vld [vmem:[#allocation5 + $0x138] sm:$0xff]
    %v138 = vld [vmem:[#allocation5 + $0x140] sm:$0xff]
    %v139 = vld [vmem:[#allocation5 + $0x148] sm:$0xff]
    %v140 = vld [vmem:[#allocation5 + $0x150] sm:$0xff]
    %v141 = vld [vmem:[#allocation5 + $0x158] sm:$0xff]
    %v142 = vld [vmem:[#allocation5 + $0x160] sm:$0xff]
    %v143 = vld [vmem:[#allocation5 + $0x168] sm:$0xff]
    %v144 = vld [vmem:[#allocation5 + $0x170] sm:$0xff]
    %v145 = vld [vmem:[#allocation5 + $0x178] sm:$0xff]
    %v146 = vld [vmem:[#allocation5 + $0x180] sm:$0xff]
    %v147 = vld [vmem:[#allocation5 + $0x188] sm:$0xff]
    %v148 = vld [vmem:[#allocation5 + $0x190] sm:$0xff]
    %v149 = vld [vmem:[#allocation5 + $0x198] sm:$0xff]
    %v150 = vld [vmem:[#allocation5 + $0x1a0] sm:$0xff]
    %v151 = vld [vmem:[#allocation5 + $0x1a8] sm:$0xff]
    %v152 = vld [vmem:[#allocation5 + $0x1b0] sm:$0xff]
    %v153 = vld [vmem:[#allocation5 + $0x1b8] sm:$0xff]
    %v154 = vld [vmem:[#allocation5 + $0x1c0] sm:$0xff]
    %v155 = vld [vmem:[#allocation5 + $0x1c8] sm:$0xff]
    %v156 = vld [vmem:[#allocation5 + $0x1d0] sm:$0xff]
    %v157 = vld [vmem:[#allocation5 + $0x1d8] sm:$0xff]
    %v158 = vld [vmem:[#allocation5 + $0x1e0] sm:$0xff]
    %v159 = vld [vmem:[#allocation5 + $0x1e8] sm:$0xff]
    %v160 = vld [vmem:[#allocation5 + $0x1f0] sm:$0xff]
    %v161 = vld [vmem:[#allocation5 + $0x1f8] sm:$0xff]
    %v162 = vld [vmem:[%s5] sm:$0xf]
    %v164 = vperm.slane %v162, 0
    %v165 = vperm.slane %v162, 1
    %v166 = vperm.slane %v162, 2
    %v167 = vperm.slane %v162, 3
    %v172 = vld [vmem:[%s6] sm:$0x1]
    %v173 = vld [vmem:[#allocation2] sm:$0x1]
    %v174 = vld [vmem:[%s0] sm:$0xff]
    %v175 = vld [vmem:[%s0 + $0x8] sm:$0xff]
    %v176 = vld [vmem:[%s0 + $0x10] sm:$0xff]
    %v177 = vld [vmem:[%s0 + $0x18] sm:$0xff]
    %v178 = vld [vmem:[%s0 + $0x20] sm:$0xff]
    %v179 = vld [vmem:[%s0 + $0x28] sm:$0xff]
    %v180 = vld [vmem:[%s0 + $0x30] sm:$0xff]
    %v181 = vld [vmem:[%s0 + $0x38] sm:$0xff]
    %183 = vset.pattern.permute.xlu0 0
    %184 = vperm.xlu0 %183, %v174
    %v185 = vpop.permute.xlu0 %184
    %188 = vset.pattern.permute.xlu0 0
    %189 = vperm.xlu0 %188, %v175
    %v190 = vpop.permute.xlu0 %189
    %193 = vset.pattern.permute.xlu0 0
    %194 = vperm.xlu0 %193, %v176
    %v195 = vpop.permute.xlu0 %194
    %198 = vset.pattern.permute.xlu0 0
    %199 = vperm.xlu0 %198, %v177
    %v200 = vpop.permute.xlu0 %199
    %203 = vset.pattern.permute.xlu0 0
    %204 = vperm.xlu0 %203, %v178
    %v205 = vpop.permute.xlu0 %204
    %208 = vset.pattern.permute.xlu0 0
    %209 = vperm.xlu0 %208, %v179
    %v210 = vpop.permute.xlu0 %209
    %213 = vset.pattern.permute.xlu0 0
    %214 = vperm.xlu0 %213, %v180
    %v215 = vpop.permute.xlu0 %214
    %218 = vset.pattern.permute.xlu0 0
    %219 = vperm.xlu0 %218, %v181
    %v220 = vpop.permute.xlu0 %219
    %v223 = vperm.slane %v64, 0
    %v224 = vperm.slane %v64, 1
    %v225 = vperm.slane %v64, 2
    %v226 = vperm.slane %v64, 3
    %v231 = vmul.f32 %v185, %v223
    %v232 = vmul.f32 %v185, %v224
    %v233 = vmul.f32 %v185, %v225
    %v234 = vmul.f32 %v185, %v226
    %v235 = vmul.f32 %v190, %v223
    %v236 = vmul.f32 %v190, %v224
    %v237 = vmul.f32 %v190, %v225
    %v238 = vmul.f32 %v190, %v226
    %v239 = vmul.f32 %v195, %v223
    %v240 = vmul.f32 %v195, %v224
    %v241 = vmul.f32 %v195, %v225
    %v242 = vmul.f32 %v195, %v226
    %v243 = vmul.f32 %v200, %v223
    %v244 = vmul.f32 %v200, %v224
    %v245 = vmul.f32 %v200, %v225
    %v246 = vmul.f32 %v200, %v226
    %v247 = vmul.f32 %v205, %v223
    %v248 = vmul.f32 %v205, %v224
    %v249 = vmul.f32 %v205, %v225
    %v250 = vmul.f32 %v205, %v226
    %v251 = vmul.f32 %v210, %v223
    %v252 = vmul.f32 %v210, %v224
    %v253 = vmul.f32 %v210, %v225
    %v254 = vmul.f32 %v210, %v226
    %v255 = vmul.f32 %v215, %v223
    %v256 = vmul.f32 %v215, %v224
    %v257 = vmul.f32 %v215, %v225
    %v258 = vmul.f32 %v215, %v226
    %v259 = vmul.f32 %v220, %v223
    %v260 = vmul.f32 %v220, %v224
    %v261 = vmul.f32 %v220, %v225
    %v262 = vmul.f32 %v220, %v226
    %v264 = vperm.slane %v65, 0
    %v265 = vperm.slane %v65, 1
    %v266 = vperm.slane %v65, 2
    %v267 = vperm.slane %v65, 3
    %v272 = vadd.f32 %v231, %v264
    %v273 = vadd.f32 %v232, %v265
    %v274 = vadd.f32 %v233, %v266
    %v275 = vadd.f32 %v234, %v267
    %v276 = vadd.f32 %v235, %v264
    %v277 = vadd.f32 %v236, %v265
    %v278 = vadd.f32 %v237, %v266
    %v279 = vadd.f32 %v238, %v267
    %v280 = vadd.f32 %v239, %v264
    %v281 = vadd.f32 %v240, %v265
    %v282 = vadd.f32 %v241, %v266
    %v283 = vadd.f32 %v242, %v267
    %v284 = vadd.f32 %v243, %v264
    %v285 = vadd.f32 %v244, %v265
    %v286 = vadd.f32 %v245, %v266
    %v287 = vadd.f32 %v246, %v267
    %v288 = vadd.f32 %v247, %v264
    %v289 = vadd.f32 %v248, %v265
    %v290 = vadd.f32 %v249, %v266
    %v291 = vadd.f32 %v250, %v267
    %v292 = vadd.f32 %v251, %v264
    %v293 = vadd.f32 %v252, %v265
    %v294 = vadd.f32 %v253, %v266
    %v295 = vadd.f32 %v254, %v267
    %v296 = vadd.f32 %v255, %v264
    %v297 = vadd.f32 %v256, %v265
    %v298 = vadd.f32 %v257, %v266
    %v299 = vadd.f32 %v258, %v267
    %v300 = vadd.f32 %v259, %v264
    %v301 = vadd.f32 %v260, %v265
    %v302 = vadd.f32 %v261, %v266
    %v303 = vadd.f32 %v262, %v267
    %v336 = vunpack.c.l.b16 %v66
    %v337 = vunpack.c.h.b16 %v66
    %v338 = vunpack.c.l.b16 %v67
    %v339 = vunpack.c.h.b16 %v67
    %v340 = vunpack.c.l.b16 %v68
    %v341 = vunpack.c.h.b16 %v68
    %v342 = vunpack.c.l.b16 %v69
    %v343 = vunpack.c.h.b16 %v69
    %v344 = vunpack.c.l.b16 %v70
    %v345 = vunpack.c.h.b16 %v70
    %v346 = vunpack.c.l.b16 %v71
    %v347 = vunpack.c.h.b16 %v71
    %v348 = vunpack.c.l.b16 %v72
    %v349 = vunpack.c.h.b16 %v72
    %v350 = vunpack.c.l.b16 %v73
    %v351 = vunpack.c.h.b16 %v73
    %v352 = vunpack.c.l.b16 %v74
    %v353 = vunpack.c.h.b16 %v74
    %v354 = vunpack.c.l.b16 %v75
    %v355 = vunpack.c.h.b16 %v75
    %v356 = vunpack.c.l.b16 %v76
    %v357 = vunpack.c.h.b16 %v76
    %v358 = vunpack.c.l.b16 %v77
    %v359 = vunpack.c.h.b16 %v77
    %v360 = vunpack.c.l.b16 %v78
    %v361 = vunpack.c.h.b16 %v78
    %v362 = vunpack.c.l.b16 %v79
    %v363 = vunpack.c.h.b16 %v79
    %v364 = vunpack.c.l.b16 %v80
    %v365 = vunpack.c.h.b16 %v80
    %v366 = vunpack.c.l.b16 %v81
    %v367 = vunpack.c.h.b16 %v81
    %v368 = vunpack.c.l.b16 %v82
    %v369 = vunpack.c.h.b16 %v82
    %v370 = vunpack.c.l.b16 %v83
    %v371 = vunpack.c.h.b16 %v83
    %v372 = vunpack.c.l.b16 %v84
    %v373 = vunpack.c.h.b16 %v84
    %v374 = vunpack.c.l.b16 %v85
    %v375 = vunpack.c.h.b16 %v85
    %v376 = vunpack.c.l.b16 %v86
    %v377 = vunpack.c.h.b16 %v86
    %v378 = vunpack.c.l.b16 %v87
    %v379 = vunpack.c.h.b16 %v87
    %v380 = vunpack.c.l.b16 %v88
    %v381 = vunpack.c.h.b16 %v88
    %v382 = vunpack.c.l.b16 %v89
    %v383 = vunpack.c.h.b16 %v89
    %v384 = vunpack.c.l.b16 %v90
    %v385 = vunpack.c.h.b16 %v90
    %v386 = vunpack.c.l.b16 %v91
    %v387 = vunpack.c.h.b16 %v91
    %v388 = vunpack.c.l.b16 %v92
    %v389 = vunpack.c.h.b16 %v92
    %v390 = vunpack.c.l.b16 %v93
    %v391 = vunpack.c.h.b16 %v93
    %v392 = vunpack.c.l.b16 %v94
    %v393 = vunpack.c.h.b16 %v94
    %v394 = vunpack.c.l.b16 %v95
    %v395 = vunpack.c.h.b16 %v95
    %v396 = vunpack.c.l.b16 %v96
    %v397 = vunpack.c.h.b16 %v96
    %v398 = vunpack.c.l.b16 %v97
    %v399 = vunpack.c.h.b16 %v97
    %v400 = vpack.c.b16 %v340, %v336
    %v401 = vpack.c.b16 %v341, %v337
    %v402 = vpack.c.b16 %v342, %v338
    %v403 = vpack.c.b16 %v343, %v339
    %v404 = vpack.c.b16 %v348, %v344
    %v405 = vpack.c.b16 %v349, %v345
    %v406 = vpack.c.b16 %v350, %v346
    %v407 = vpack.c.b16 %v351, %v347
    %v408 = vpack.c.b16 %v356, %v352
    %v409 = vpack.c.b16 %v357, %v353
    %v410 = vpack.c.b16 %v358, %v354
    %v411 = vpack.c.b16 %v359, %v355
    %v412 = vpack.c.b16 %v364, %v360
    %v413 = vpack.c.b16 %v365, %v361
    %v414 = vpack.c.b16 %v366, %v362
    %v415 = vpack.c.b16 %v367, %v363
    %v416 = vpack.c.b16 %v372, %v368
    %v417 = vpack.c.b16 %v373, %v369
    %v418 = vpack.c.b16 %v374, %v370
    %v419 = vpack.c.b16 %v375, %v371
    %v420 = vpack.c.b16 %v380, %v376
    %v421 = vpack.c.b16 %v381, %v377
    %v422 = vpack.c.b16 %v382, %v378
    %v423 = vpack.c.b16 %v383, %v379
    %v424 = vpack.c.b16 %v388, %v384
    %v425 = vpack.c.b16 %v389, %v385
    %v426 = vpack.c.b16 %v390, %v386
    %v427 = vpack.c.b16 %v391, %v387
    %v428 = vpack.c.b16 %v396, %v392
    %v429 = vpack.c.b16 %v397, %v393
    %v430 = vpack.c.b16 %v398, %v394
    %v431 = vpack.c.b16 %v399, %v395
    %464 = vmatpush.bf16.msra.mxu0 %v428
    %465 = vmatpush.bf16.msra.mxu0 %v424
    %466 = vmatpush.bf16.msra.mxu0 %v420
    %467 = vmatpush.bf16.msra.mxu0 %v416
    %468 = vmatpush.bf16.msra.mxu0 %v412
    %469 = vmatpush.bf16.msra.mxu0 %v408
    %470 = vmatpush.bf16.msra.mxu0 %v404
    %471 = vmatpush.bf16.msra.mxu0 %v400
    %472 = vmatmul.bf16.gmra.mxu0 0
    %v473 = vpop.f32.mrf.mxu0
    %v474 = vadd.f32 0.0, %v473
    %v475 = vpop.f32.mrf.mxu0
    %476 = vdwg.mxu0
    %477 = vmatpush.bf16.msra.mxu0 %v429
    %478 = vmatpush.bf16.msra.mxu0 %v425
    %479 = vmatpush.bf16.msra.mxu0 %v421
    %480 = vmatpush.bf16.msra.mxu0 %v417
    %481 = vmatpush.bf16.msra.mxu0 %v413
    %482 = vmatpush.bf16.msra.mxu0 %v409
    %483 = vmatpush.bf16.msra.mxu0 %v405
    %484 = vmatpush.bf16.msra.mxu0 %v401
    %485 = vmatmul.bf16.gmra.mxu0 0
    %v486 = vpop.f32.mrf.mxu0
    %v487 = vadd.f32 0.0, %v486
    %v488 = vpop.f32.mrf.mxu0
    %489 = vdwg.mxu0
    %490 = vmatpush.bf16.msra.mxu0 %v430
    %491 = vmatpush.bf16.msra.mxu0 %v426
    %492 = vmatpush.bf16.msra.mxu0 %v422
    %493 = vmatpush.bf16.msra.mxu0 %v418
    %494 = vmatpush.bf16.msra.mxu0 %v414
    %495 = vmatpush.bf16.msra.mxu0 %v410
    %496 = vmatpush.bf16.msra.mxu0 %v406
    %497 = vmatpush.bf16.msra.mxu0 %v402
    %498 = vmatmul.bf16.gmra.mxu0 0
    %v499 = vpop.f32.mrf.mxu0
    %v500 = vadd.f32 0.0, %v499
    %v501 = vpop.f32.mrf.mxu0
    %502 = vdwg.mxu0
    %503 = vmatpush.bf16.msra.mxu0 %v431
    %504 = vmatpush.bf16.msra.mxu0 %v427
    %505 = vmatpush.bf16.msra.mxu0 %v423
    %506 = vmatpush.bf16.msra.mxu0 %v419
    %507 = vmatpush.bf16.msra.mxu0 %v415
    %508 = vmatpush.bf16.msra.mxu0 %v411
    %509 = vmatpush.bf16.msra.mxu0 %v407
    %510 = vmatpush.bf16.msra.mxu0 %v403
    %511 = vmatmul.bf16.gmra.mxu0 0
    %v512 = vpop.f32.mrf.mxu0
    %v513 = vadd.f32 0.0, %v512
    %v514 = vpop.f32.mrf.mxu0
    %515 = vdwg.mxu0
    %v516 = vadd.f32 %v272, %v474
    %v517 = vadd.f32 %v273, %v487
    %v518 = vadd.f32 %v274, %v500
    %v519 = vadd.f32 %v275, %v513
    %v520 = vmul.f32 %v516, 0.5
    %v521 = vmul.f32 %v517, 0.5
    %v522 = vmul.f32 %v518, 0.5
    %v523 = vtanh.pop %v520
    %v524 = vtanh.pop %v521
    %v525 = vtanh.pop %v522
    %v526 = vadd.f32 %v523, 1.0
    %v527 = vadd.f32 %v524, 1.0
    %v528 = vadd.f32 %v525, 1.0
    %v529 = vmul.f32 %v526, 0.5
    %v530 = vmul.f32 %v527, 0.5
    %v531 = vmul.f32 %v528, 0.5
    %v532 = vtanh.pop %v519
    %v533 = vmul.f32 %v530, 0.0
    %v534 = vmul.f32 %v529, %v532
    %v535 = vadd.f32 %v533, %v534
    %v536 = vtanh.pop %v535
    %v537 = vmul.f32 %v531, %v536
    %v538 = vpack.c.bf16 %v537, %v537
    %v539 = vpack.c.bf16 0.0, 0.0
    %v604 = vunpack.c.l.b16 %v98
    %v605 = vunpack.c.h.b16 %v98
    %v606 = vunpack.c.l.b16 %v99
    %v607 = vunpack.c.h.b16 %v99
    %v608 = vunpack.c.l.b16 %v100
    %v609 = vunpack.c.h.b16 %v100
    %v610 = vunpack.c.l.b16 %v101
    %v611 = vunpack.c.h.b16 %v101
    %v612 = vunpack.c.l.b16 %v102
    %v613 = vunpack.c.h.b16 %v102
    %v614 = vunpack.c.l.b16 %v103
    %v615 = vunpack.c.h.b16 %v103
    %v616 = vunpack.c.l.b16 %v104
    %v617 = vunpack.c.h.b16 %v104
    %v618 = vunpack.c.l.b16 %v105
    %v619 = vunpack.c.h.b16 %v105
    %v620 = vunpack.c.l.b16 %v106
    %v621 = vunpack.c.h.b16 %v106
    %v622 = vunpack.c.l.b16 %v107
    %v623 = vunpack.c.h.b16 %v107
    %v624 = vunpack.c.l.b16 %v108
    %v625 = vunpack.c.h.b16 %v108
    %v626 = vunpack.c.l.b16 %v109
    %v627 = vunpack.c.h.b16 %v109
    %v628 = vunpack.c.l.b16 %v110
    %v629 = vunpack.c.h.b16 %v110
    %v630 = vunpack.c.l.b16 %v111
    %v631 = vunpack.c.h.b16 %v111
    %v632 = vunpack.c.l.b16 %v112
    %v633 = vunpack.c.h.b16 %v112
    %v634 = vunpack.c.l.b16 %v113
    %v635 = vunpack.c.h.b16 %v113
    %v636 = vunpack.c.l.b16 %v114
    %v637 = vunpack.c.h.b16 %v114
    %v638 = vunpack.c.l.b16 %v115
    %v639 = vunpack.c.h.b16 %v115
    %v640 = vunpack.c.l.b16 %v116
    %v641 = vunpack.c.h.b16 %v116
    %v642 = vunpack.c.l.b16 %v117
    %v643 = vunpack.c.h.b16 %v117
    %v644 = vunpack.c.l.b16 %v118
    %v645 = vunpack.c.h.b16 %v118
    %v646 = vunpack.c.l.b16 %v119
    %v647 = vunpack.c.h.b16 %v119
    %v648 = vunpack.c.l.b16 %v120
    %v649 = vunpack.c.h.b16 %v120
    %v650 = vunpack.c.l.b16 %v121
    %v651 = vunpack.c.h.b16 %v121
    %v652 = vunpack.c.l.b16 %v122
    %v653 = vunpack.c.h.b16 %v122
    %v654 = vunpack.c.l.b16 %v123
    %v655 = vunpack.c.h.b16 %v123
    %v656 = vunpack.c.l.b16 %v124
    %v657 = vunpack.c.h.b16 %v124
    %v658 = vunpack.c.l.b16 %v125
    %v659 = vunpack.c.h.b16 %v125
    %v660 = vunpack.c.l.b16 %v126
    %v661 = vunpack.c.h.b16 %v126
    %v662 = vunpack.c.l.b16 %v127
    %v663 = vunpack.c.h.b16 %v127
    %v664 = vunpack.c.l.b16 %v128
    %v665 = vunpack.c.h.b16 %v128
    %v666 = vunpack.c.l.b16 %v129
    %v667 = vunpack.c.h.b16 %v129
    %v668 = vunpack.c.l.b16 %v130
    %v669 = vunpack.c.h.b16 %v130
    %v670 = vunpack.c.l.b16 %v131
    %v671 = vunpack.c.h.b16 %v131
    %v672 = vunpack.c.l.b16 %v132
    %v673 = vunpack.c.h.b16 %v132
    %v674 = vunpack.c.l.b16 %v133
    %v675 = vunpack.c.h.b16 %v133
    %v676 = vunpack.c.l.b16 %v134
    %v677 = vunpack.c.h.b16 %v134
    %v678 = vunpack.c.l.b16 %v135
    %v679 = vunpack.c.h.b16 %v135
    %v680 = vunpack.c.l.b16 %v136
    %v681 = vunpack.c.h.b16 %v136
    %v682 = vunpack.c.l.b16 %v137
    %v683 = vunpack.c.h.b16 %v137
    %v684 = vunpack.c.l.b16 %v138
    %v685 = vunpack.c.h.b16 %v138
    %v686 = vunpack.c.l.b16 %v139
    %v687 = vunpack.c.h.b16 %v139
    %v688 = vunpack.c.l.b16 %v140
    %v689 = vunpack.c.h.b16 %v140
    %v690 = vunpack.c.l.b16 %v141
    %v691 = vunpack.c.h.b16 %v141
    %v692 = vunpack.c.l.b16 %v142
    %v693 = vunpack.c.h.b16 %v142
    %v694 = vunpack.c.l.b16 %v143
    %v695 = vunpack.c.h.b16 %v143
    %v696 = vunpack.c.l.b16 %v144
    %v697 = vunpack.c.h.b16 %v144
    %v698 = vunpack.c.l.b16 %v145
    %v699 = vunpack.c.h.b16 %v145
    %v700 = vunpack.c.l.b16 %v146
    %v701 = vunpack.c.h.b16 %v146
    %v702 = vunpack.c.l.b16 %v147
    %v703 = vunpack.c.h.b16 %v147
    %v704 = vunpack.c.l.b16 %v148
    %v705 = vunpack.c.h.b16 %v148
    %v706 = vunpack.c.l.b16 %v149
    %v707 = vunpack.c.h.b16 %v149
    %v708 = vunpack.c.l.b16 %v150
    %v709 = vunpack.c.h.b16 %v150
    %v710 = vunpack.c.l.b16 %v151
    %v711 = vunpack.c.h.b16 %v151
    %v712 = vunpack.c.l.b16 %v152
    %v713 = vunpack.c.h.b16 %v152
    %v714 = vunpack.c.l.b16 %v153
    %v715 = vunpack.c.h.b16 %v153
    %v716 = vunpack.c.l.b16 %v154
    %v717 = vunpack.c.h.b16 %v154
    %v718 = vunpack.c.l.b16 %v155
    %v719 = vunpack.c.h.b16 %v155
    %v720 = vunpack.c.l.b16 %v156
    %v721 = vunpack.c.h.b16 %v156
    %v722 = vunpack.c.l.b16 %v157
    %v723 = vunpack.c.h.b16 %v157
    %v724 = vunpack.c.l.b16 %v158
    %v725 = vunpack.c.h.b16 %v158
    %v726 = vunpack.c.l.b16 %v159
    %v727 = vunpack.c.h.b16 %v159
    %v728 = vunpack.c.l.b16 %v160
    %v729 = vunpack.c.h.b16 %v160
    %v730 = vunpack.c.l.b16 %v161
    %v731 = vunpack.c.h.b16 %v161
    %v732 = vpack.c.b16 %v608, %v604
    %v733 = vpack.c.b16 %v609, %v605
    %v734 = vpack.c.b16 %v610, %v606
    %v735 = vpack.c.b16 %v611, %v607
    %v736 = vpack.c.b16 %v616, %v612
    %v737 = vpack.c.b16 %v617, %v613
    %v738 = vpack.c.b16 %v618, %v614
    %v739 = vpack.c.b16 %v619, %v615
    %v740 = vpack.c.b16 %v624, %v620
    %v741 = vpack.c.b16 %v625, %v621
    %v742 = vpack.c.b16 %v626, %v622
    %v743 = vpack.c.b16 %v627, %v623
    %v744 = vpack.c.b16 %v632, %v628
    %v745 = vpack.c.b16 %v633, %v629
    %v746 = vpack.c.b16 %v634, %v630
    %v747 = vpack.c.b16 %v635, %v631
    %v748 = vpack.c.b16 %v640, %v636
    %v749 = vpack.c.b16 %v641, %v637
    %v750 = vpack.c.b16 %v642, %v638
    %v751 = vpack.c.b16 %v643, %v639
    %v752 = vpack.c.b16 %v648, %v644
    %v753 = vpack.c.b16 %v649, %v645
    %v754 = vpack.c.b16 %v650, %v646
    %v755 = vpack.c.b16 %v651, %v647
    %v756 = vpack.c.b16 %v656, %v652
    %v757 = vpack.c.b16 %v657, %v653
    %v758 = vpack.c.b16 %v658, %v654
    %v759 = vpack.c.b16 %v659, %v655
    %v760 = vpack.c.b16 %v664, %v660
    %v761 = vpack.c.b16 %v665, %v661
    %v762 = vpack.c.b16 %v666, %v662
    %v763 = vpack.c.b16 %v667, %v663
    %v764 = vpack.c.b16 %v672, %v668
    %v765 = vpack.c.b16 %v673, %v669
    %v766 = vpack.c.b16 %v674, %v670
    %v767 = vpack.c.b16 %v675, %v671
    %v768 = vpack.c.b16 %v680, %v676
    %v769 = vpack.c.b16 %v681, %v677
    %v770 = vpack.c.b16 %v682, %v678
    %v771 = vpack.c.b16 %v683, %v679
    %v772 = vpack.c.b16 %v688, %v684
    %v773 = vpack.c.b16 %v689, %v685
    %v774 = vpack.c.b16 %v690, %v686
    %v775 = vpack.c.b16 %v691, %v687
    %v776 = vpack.c.b16 %v696, %v692
    %v777 = vpack.c.b16 %v697, %v693
    %v778 = vpack.c.b16 %v698, %v694
    %v779 = vpack.c.b16 %v699, %v695
    %v780 = vpack.c.b16 %v704, %v700
    %v781 = vpack.c.b16 %v705, %v701
    %v782 = vpack.c.b16 %v706, %v702
    %v783 = vpack.c.b16 %v707, %v703
    %v784 = vpack.c.b16 %v712, %v708
    %v785 = vpack.c.b16 %v713, %v709
    %v786 = vpack.c.b16 %v714, %v710
    %v787 = vpack.c.b16 %v715, %v711
    %v788 = vpack.c.b16 %v720, %v716
    %v789 = vpack.c.b16 %v721, %v717
    %v790 = vpack.c.b16 %v722, %v718
    %v791 = vpack.c.b16 %v723, %v719
    %v792 = vpack.c.b16 %v728, %v724
    %v793 = vpack.c.b16 %v729, %v725
    %v794 = vpack.c.b16 %v730, %v726
    %v795 = vpack.c.b16 %v731, %v727
    %860 = vmatpush.bf16.msra.mxu0 %v760
    %861 = vmatpush.bf16.msra.mxu0 %v756
    %862 = vmatpush.bf16.msra.mxu0 %v752
    %863 = vmatpush.bf16.msra.mxu0 %v748
    %864 = vmatpush.bf16.msra.mxu0 %v744
    %865 = vmatpush.bf16.msra.mxu0 %v740
    %866 = vmatpush.bf16.msra.mxu0 %v736
    %867 = vmatpush.bf16.msra.mxu0 %v732
    %868 = vmatmul.bf16.gmra.mxu0 %v538
    %v869 = vpop.f32.mrf.mxu0
    %v870 = vadd.f32 %v164, %v869
    %v871 = vpop.f32.mrf.mxu0
    %872 = vdwg.mxu0
    %873 = vmatpush.bf16.msra.mxu0 %v792
    %874 = vmatpush.bf16.msra.mxu0 %v788
    %875 = vmatpush.bf16.msra.mxu0 %v784
    %876 = vmatpush.bf16.msra.mxu0 %v780
    %877 = vmatpush.bf16.msra.mxu0 %v776
    %878 = vmatpush.bf16.msra.mxu0 %v772
    %879 = vmatpush.bf16.msra.mxu0 %v768
    %880 = vmatpush.bf16.msra.mxu0 %v764
    %881 = vmatmul.bf16.gmra.mxu0 %v539
    %v882 = vpop.f32.mrf.mxu0
    %v883 = vadd.f32 %v870, %v882
    %v884 = vpop.f32.mrf.mxu0
    %885 = vdwg.mxu0
    %886 = vmatpush.bf16.msra.mxu0 %v761
    %887 = vmatpush.bf16.msra.mxu0 %v757
    %888 = vmatpush.bf16.msra.mxu0 %v753
    %889 = vmatpush.bf16.msra.mxu0 %v749
    %890 = vmatpush.bf16.msra.mxu0 %v745
    %891 = vmatpush.bf16.msra.mxu0 %v741
    %892 = vmatpush.bf16.msra.mxu0 %v737
    %893 = vmatpush.bf16.msra.mxu0 %v733
    %894 = vmatmul.bf16.gmra.mxu0 %v538
    %v895 = vpop.f32.mrf.mxu0
    %v896 = vadd.f32 %v165, %v895
    %v897 = vpop.f32.mrf.mxu0
    %898 = vdwg.mxu0
    %899 = vmatpush.bf16.msra.mxu0 %v793
    %900 = vmatpush.bf16.msra.mxu0 %v789
    %901 = vmatpush.bf16.msra.mxu0 %v785
    %902 = vmatpush.bf16.msra.mxu0 %v781
    %903 = vmatpush.bf16.msra.mxu0 %v777
    %904 = vmatpush.bf16.msra.mxu0 %v773
    %905 = vmatpush.bf16.msra.mxu0 %v769
    %906 = vmatpush.bf16.msra.mxu0 %v765
    %907 = vmatmul.bf16.gmra.mxu0 %v539
    %v908 = vpop.f32.mrf.mxu0
    %v909 = vadd.f32 %v896, %v908
    %v910 = vpop.f32.mrf.mxu0
    %911 = vdwg.mxu0
    %912 = vmatpush.bf16.msra.mxu0 %v762
    %913 = vmatpush.bf16.msra.mxu0 %v758
    %914 = vmatpush.bf16.msra.mxu0 %v754
    %915 = vmatpush.bf16.msra.mxu0 %v750
    %916 = vmatpush.bf16.msra.mxu0 %v746
    %917 = vmatpush.bf16.msra.mxu0 %v742
    %918 = vmatpush.bf16.msra.mxu0 %v738
    %919 = vmatpush.bf16.msra.mxu0 %v734
    %920 = vmatmul.bf16.gmra.mxu0 %v538
    %v921 = vpop.f32.mrf.mxu0
    %v922 = vadd.f32 %v166, %v921
    %v923 = vpop.f32.mrf.mxu0
    %924 = vdwg.mxu0
    %925 = vmatpush.bf16.msra.mxu0 %v794
    %926 = vmatpush.bf16.msra.mxu0 %v790
    %927 = vmatpush.bf16.msra.mxu0 %v786
    %928 = vmatpush.bf16.msra.mxu0 %v782
    %929 = vmatpush.bf16.msra.mxu0 %v778
    %930 = vmatpush.bf16.msra.mxu0 %v774
    %931 = vmatpush.bf16.msra.mxu0 %v770
    %932 = vmatpush.bf16.msra.mxu0 %v766
    %933 = vmatmul.bf16.gmra.mxu0 %v539
    %v934 = vpop.f32.mrf.mxu0
    %v935 = vadd.f32 %v922, %v934
    %v936 = vpop.f32.mrf.mxu0
    %937 = vdwg.mxu0
    %938 = vmatpush.bf16.msra.mxu0 %v763
    %939 = vmatpush.bf16.msra.mxu0 %v759
    %940 = vmatpush.bf16.msra.mxu0 %v755
    %941 = vmatpush.bf16.msra.mxu0 %v751
    %942 = vmatpush.bf16.msra.mxu0 %v747
    %943 = vmatpush.bf16.msra.mxu0 %v743
    %944 = vmatpush.bf16.msra.mxu0 %v739
    %945 = vmatpush.bf16.msra.mxu0 %v735
    %946 = vmatmul.bf16.gmra.mxu0 %v538
    %v947 = vpop.f32.mrf.mxu0
    %v948 = vadd.f32 %v167, %v947
    %v949 = vpop.f32.mrf.mxu0
    %950 = vdwg.mxu0
    %951 = vmatpush.bf16.msra.mxu0 %v795
    %952 = vmatpush.bf16.msra.mxu0 %v791
    %953 = vmatpush.bf16.msra.mxu0 %v787
    %954 = vmatpush.bf16.msra.mxu0 %v783
    %955 = vmatpush.bf16.msra.mxu0 %v779
    %956 = vmatpush.bf16.msra.mxu0 %v775
    %957 = vmatpush.bf16.msra.mxu0 %v771
    %958 = vmatpush.bf16.msra.mxu0 %v767
    %959 = vmatmul.bf16.gmra.mxu0 %v539
    %v960 = vpop.f32.mrf.mxu0
    %v961 = vadd.f32 %v948, %v960
    %v962 = vpop.f32.mrf.mxu0
    %963 = vdwg.mxu0
    %v964 = vmul.f32 %v883, 0.5
    %v965 = vmul.f32 %v909, 0.5
    %v966 = vmul.f32 %v935, 0.5
    %v967 = vtanh.pop %v964
    %v968 = vtanh.pop %v965
    %v969 = vtanh.pop %v966
    %v970 = vadd.f32 %v967, 1.0
    %v971 = vadd.f32 %v968, 1.0
    %v972 = vadd.f32 %v969, 1.0
    %v973 = vmul.f32 %v970, 0.5
    %v974 = vmul.f32 %v971, 0.5
    %v975 = vmul.f32 %v972, 0.5
    %v976 = vtanh.pop %v961
    %v977 = vmul.f32 %v974, 0.0
    %v978 = vmul.f32 %v973, %v976
    %v979 = vadd.f32 %v977, %v978
    %v980 = vtanh.pop %v979
    %v981 = vmul.f32 %v975, %v980
    %982 = vmatpush.bf16.msra.mxu0 %v428
    %983 = vmatpush.bf16.msra.mxu0 %v424
    %984 = vmatpush.bf16.msra.mxu0 %v420
    %985 = vmatpush.bf16.msra.mxu0 %v416
    %986 = vmatpush.bf16.msra.mxu0 %v412
    %987 = vmatpush.bf16.msra.mxu0 %v408
    %988 = vmatpush.bf16.msra.mxu0 %v404
    %989 = vmatpush.bf16.msra.mxu0 %v400
    %990 = vmatmul.bf16.gmra.mxu0 %v538
    %v991 = vpop.f32.mrf.mxu0
    %v992 = vadd.f32 0.0, %v991
    %v993 = vpop.f32.mrf.mxu0
    %994 = vdwg.mxu0
    %995 = vmatpush.bf16.msra.mxu0 %v429
    %996 = vmatpush.bf16.msra.mxu0 %v425
    %997 = vmatpush.bf16.msra.mxu0 %v421
    %998 = vmatpush.bf16.msra.mxu0 %v417
    %999 = vmatpush.bf16.msra.mxu0 %v413
    %1000 = vmatpush.bf16.msra.mxu0 %v409
    %1001 = vmatpush.bf16.msra.mxu0 %v405
    %1002 = vmatpush.bf16.msra.mxu0 %v401
    %1003 = vmatmul.bf16.gmra.mxu0 %v538
    %v1004 = vpop.f32.mrf.mxu0
    %v1005 = vadd.f32 0.0, %v1004
    %v1006 = vpop.f32.mrf.mxu0
    %1007 = vdwg.mxu0
    %1008 = vmatpush.bf16.msra.mxu0 %v430
    %1009 = vmatpush.bf16.msra.mxu0 %v426
    %1010 = vmatpush.bf16.msra.mxu0 %v422
    %1011 = vmatpush.bf16.msra.mxu0 %v418
    %1012 = vmatpush.bf16.msra.mxu0 %v414
    %1013 = vmatpush.bf16.msra.mxu0 %v410
    %1014 = vmatpush.bf16.msra.mxu0 %v406
    %1015 = vmatpush.bf16.msra.mxu0 %v402
    %1016 = vmatmul.bf16.gmra.mxu0 %v538
    %v1017 = vpop.f32.mrf.mxu0
    %v1018 = vadd.f32 0.0, %v1017
    %v1019 = vpop.f32.mrf.mxu0
    %1020 = vdwg.mxu0
    %1021 = vmatpush.bf16.msra.mxu0 %v431
    %1022 = vmatpush.bf16.msra.mxu0 %v427
    %1023 = vmatpush.bf16.msra.mxu0 %v423
    %1024 = vmatpush.bf16.msra.mxu0 %v419
    %1025 = vmatpush.bf16.msra.mxu0 %v415
    %1026 = vmatpush.bf16.msra.mxu0 %v411
    %1027 = vmatpush.bf16.msra.mxu0 %v407
    %1028 = vmatpush.bf16.msra.mxu0 %v403
    %1029 = vmatmul.bf16.gmra.mxu0 %v538
    %v1030 = vpop.f32.mrf.mxu0
    %v1031 = vadd.f32 0.0, %v1030
    %v1032 = vpop.f32.mrf.mxu0
    %1033 = vdwg.mxu0
    %v1034 = vadd.f32 %v276, %v992
    %v1035 = vadd.f32 %v277, %v1005
    %v1036 = vadd.f32 %v278, %v1018
    %v1037 = vadd.f32 %v279, %v1031
    %v1038 = vmul.f32 %v1034, 0.5
    %v1039 = vmul.f32 %v1035, 0.5
    %v1040 = vmul.f32 %v1036, 0.5
    %v1041 = vtanh.pop %v1038
    %v1042 = vtanh.pop %v1039
    %v1043 = vtanh.pop %v1040
    %v1044 = vadd.f32 %v1041, 1.0
    %v1045 = vadd.f32 %v1042, 1.0
    %v1046 = vadd.f32 %v1043, 1.0
    %v1047 = vmul.f32 %v1044, 0.5
    %v1048 = vmul.f32 %v1045, 0.5
    %v1049 = vmul.f32 %v1046, 0.5
    %v1050 = vtanh.pop %v1037
    %v1051 = vmul.f32 %v1048, %v535
    %v1052 = vmul.f32 %v1047, %v1050
    %v1053 = vadd.f32 %v1051, %v1052
    %v1054 = vtanh.pop %v1053
    %v1055 = vmul.f32 %v1049, %v1054
    %v1056 = vpack.c.bf16 %v1055, %v1055
    %v1057 = vpack.c.bf16 %v981, %v981
    %1058 = vmatpush.bf16.msra.mxu0 %v760
    %1059 = vmatpush.bf16.msra.mxu0 %v756
    %1060 = vmatpush.bf16.msra.mxu0 %v752
    %1061 = vmatpush.bf16.msra.mxu0 %v748
    %1062 = vmatpush.bf16.msra.mxu0 %v744
    %1063 = vmatpush.bf16.msra.mxu0 %v740
    %1064 = vmatpush.bf16.msra.mxu0 %v736
    %1065 = vmatpush.bf16.msra.mxu0 %v732
    %1066 = vmatmul.bf16.gmra.mxu0 %v1056
    %v1067 = vpop.f32.mrf.mxu0
    %v1068 = vadd.f32 %v164, %v1067
    %v1069 = vpop.f32.mrf.mxu0
    %1070 = vdwg.mxu0
    %1071 = vmatpush.bf16.msra.mxu0 %v792
    %1072 = vmatpush.bf16.msra.mxu0 %v788
    %1073 = vmatpush.bf16.msra.mxu0 %v784
    %1074 = vmatpush.bf16.msra.mxu0 %v780
    %1075 = vmatpush.bf16.msra.mxu0 %v776
    %1076 = vmatpush.bf16.msra.mxu0 %v772
    %1077 = vmatpush.bf16.msra.mxu0 %v768
    %1078 = vmatpush.bf16.msra.mxu0 %v764
    %1079 = vmatmul.bf16.gmra.mxu0 %v1057
    %v1080 = vpop.f32.mrf.mxu0
    %v1081 = vadd.f32 %v1068, %v1080
    %v1082 = vpop.f32.mrf.mxu0
    %1083 = vdwg.mxu0
    %1084 = vmatpush.bf16.msra.mxu0 %v761
    %1085 = vmatpush.bf16.msra.mxu0 %v757
    %1086 = vmatpush.bf16.msra.mxu0 %v753
    %1087 = vmatpush.bf16.msra.mxu0 %v749
    %1088 = vmatpush.bf16.msra.mxu0 %v745
    %1089 = vmatpush.bf16.msra.mxu0 %v741
    %1090 = vmatpush.bf16.msra.mxu0 %v737
    %1091 = vmatpush.bf16.msra.mxu0 %v733
    %1092 = vmatmul.bf16.gmra.mxu0 %v1056
    %v1093 = vpop.f32.mrf.mxu0
    %v1094 = vadd.f32 %v165, %v1093
    %v1095 = vpop.f32.mrf.mxu0
    %1096 = vdwg.mxu0
    %1097 = vmatpush.bf16.msra.mxu0 %v793
    %1098 = vmatpush.bf16.msra.mxu0 %v789
    %1099 = vmatpush.bf16.msra.mxu0 %v785
    %1100 = vmatpush.bf16.msra.mxu0 %v781
    %1101 = vmatpush.bf16.msra.mxu0 %v777
    %1102 = vmatpush.bf16.msra.mxu0 %v773
    %1103 = vmatpush.bf16.msra.mxu0 %v769
    %1104 = vmatpush.bf16.msra.mxu0 %v765
    %1105 = vmatmul.bf16.gmra.mxu0 %v1057
    %v1106 = vpop.f32.mrf.mxu0
    %v1107 = vadd.f32 %v1094, %v1106
    %v1108 = vpop.f32.mrf.mxu0
    %1109 = vdwg.mxu0
    %1110 = vmatpush.bf16.msra.mxu0 %v762
    %1111 = vmatpush.bf16.msra.mxu0 %v758
    %1112 = vmatpush.bf16.msra.mxu0 %v754
    %1113 = vmatpush.bf16.msra.mxu0 %v750
    %1114 = vmatpush.bf16.msra.mxu0 %v746
    %1115 = vmatpush.bf16.msra.mxu0 %v742
    %1116 = vmatpush.bf16.msra.mxu0 %v738
    %1117 = vmatpush.bf16.msra.mxu0 %v734
    %1118 = vmatmul.bf16.gmra.mxu0 %v1056
    %v1119 = vpop.f32.mrf.mxu0
    %v1120 = vadd.f32 %v166, %v1119
    %v1121 = vpop.f32.mrf.mxu0
    %1122 = vdwg.mxu0
    %1123 = vmatpush.bf16.msra.mxu0 %v794
    %1124 = vmatpush.bf16.msra.mxu0 %v790
    %1125 = vmatpush.bf16.msra.mxu0 %v786
    %1126 = vmatpush.bf16.msra.mxu0 %v782
    %1127 = vmatpush.bf16.msra.mxu0 %v778
    %1128 = vmatpush.bf16.msra.mxu0 %v774
    %1129 = vmatpush.bf16.msra.mxu0 %v770
    %1130 = vmatpush.bf16.msra.mxu0 %v766
    %1131 = vmatmul.bf16.gmra.mxu0 %v1057
    %v1132 = vpop.f32.mrf.mxu0
    %v1133 = vadd.f32 %v1120, %v1132
    %v1134 = vpop.f32.mrf.mxu0
    %1135 = vdwg.mxu0
    %1136 = vmatpush.bf16.msra.mxu0 %v763
    %1137 = vmatpush.bf16.msra.mxu0 %v759
    %1138 = vmatpush.bf16.msra.mxu0 %v755
    %1139 = vmatpush.bf16.msra.mxu0 %v751
    %1140 = vmatpush.bf16.msra.mxu0 %v747
    %1141 = vmatpush.bf16.msra.mxu0 %v743
    %1142 = vmatpush.bf16.msra.mxu0 %v739
    %1143 = vmatpush.bf16.msra.mxu0 %v735
    %1144 = vmatmul.bf16.gmra.mxu0 %v1056
    %v1145 = vpop.f32.mrf.mxu0
    %v1146 = vadd.f32 %v167, %v1145
    %v1147 = vpop.f32.mrf.mxu0
    %1148 = vdwg.mxu0
    %1149 = vmatpush.bf16.msra.mxu0 %v795
    %1150 = vmatpush.bf16.msra.mxu0 %v791
    %1151 = vmatpush.bf16.msra.mxu0 %v787
    %1152 = vmatpush.bf16.msra.mxu0 %v783
    %1153 = vmatpush.bf16.msra.mxu0 %v779
    %1154 = vmatpush.bf16.msra.mxu0 %v775
    %1155 = vmatpush.bf16.msra.mxu0 %v771
    %1156 = vmatpush.bf16.msra.mxu0 %v767
    %1157 = vmatmul.bf16.gmra.mxu0 %v1057
    %v1158 = vpop.f32.mrf.mxu0
    %v1159 = vadd.f32 %v1146, %v1158
    %v1160 = vpop.f32.mrf.mxu0
    %1161 = vdwg.mxu0
    %v1162 = vmul.f32 %v1081, 0.5
    %v1163 = vmul.f32 %v1107, 0.5
    %v1164 = vmul.f32 %v1133, 0.5
    %v1165 = vtanh.pop %v1162
    %v1166 = vtanh.pop %v1163
    %v1167 = vtanh.pop %v1164
    %v1168 = vadd.f32 %v1165, 1.0
    %v1169 = vadd.f32 %v1166, 1.0
    %v1170 = vadd.f32 %v1167, 1.0
    %v1171 = vmul.f32 %v1168, 0.5
    %v1172 = vmul.f32 %v1169, 0.5
    %v1173 = vmul.f32 %v1170, 0.5
    %v1174 = vtanh.pop %v1159
    %v1175 = vmul.f32 %v1172, %v979
    %v1176 = vmul.f32 %v1171, %v1174
    %v1177 = vadd.f32 %v1175, %v1176
    %v1178 = vtanh.pop %v1177
    %v1179 = vmul.f32 %v1173, %v1178
    %1180 = vmatpush.bf16.msra.mxu0 %v428
    %1181 = vmatpush.bf16.msra.mxu0 %v424
    %1182 = vmatpush.bf16.msra.mxu0 %v420
    %1183 = vmatpush.bf16.msra.mxu0 %v416
    %1184 = vmatpush.bf16.msra.mxu0 %v412
    %1185 = vmatpush.bf16.msra.mxu0 %v408
    %1186 = vmatpush.bf16.msra.mxu0 %v404
    %1187 = vmatpush.bf16.msra.mxu0 %v400
    %1188 = vmatmul.bf16.gmra.mxu0 %v1056
    %v1189 = vpop.f32.mrf.mxu0
    %v1190 = vadd.f32 0.0, %v1189
    %v1191 = vpop.f32.mrf.mxu0
    %1192 = vdwg.mxu0
    %1193 = vmatpush.bf16.msra.mxu0 %v429
    %1194 = vmatpush.bf16.msra.mxu0 %v425
    %1195 = vmatpush.bf16.msra.mxu0 %v421
    %1196 = vmatpush.bf16.msra.mxu0 %v417
    %1197 = vmatpush.bf16.msra.mxu0 %v413
    %1198 = vmatpush.bf16.msra.mxu0 %v409
    %1199 = vmatpush.bf16.msra.mxu0 %v405
    %1200 = vmatpush.bf16.msra.mxu0 %v401
    %1201 = vmatmul.bf16.gmra.mxu0 %v1056
    %v1202 = vpop.f32.mrf.mxu0
    %v1203 = vadd.f32 0.0, %v1202
    %v1204 = vpop.f32.mrf.mxu0
    %1205 = vdwg.mxu0
    %1206 = vmatpush.bf16.msra.mxu0 %v430
    %1207 = vmatpush.bf16.msra.mxu0 %v426
    %1208 = vmatpush.bf16.msra.mxu0 %v422
    %1209 = vmatpush.bf16.msra.mxu0 %v418
    %1210 = vmatpush.bf16.msra.mxu0 %v414
    %1211 = vmatpush.bf16.msra.mxu0 %v410
    %1212 = vmatpush.bf16.msra.mxu0 %v406
    %1213 = vmatpush.bf16.msra.mxu0 %v402
    %1214 = vmatmul.bf16.gmra.mxu0 %v1056
    %v1215 = vpop.f32.mrf.mxu0
    %v1216 = vadd.f32 0.0, %v1215
    %v1217 = vpop.f32.mrf.mxu0
    %1218 = vdwg.mxu0
    %1219 = vmatpush.bf16.msra.mxu0 %v431
    %1220 = vmatpush.bf16.msra.mxu0 %v427
    %1221 = vmatpush.bf16.msra.mxu0 %v423
    %1222 = vmatpush.bf16.msra.mxu0 %v419
    %1223 = vmatpush.bf16.msra.mxu0 %v415
    %1224 = vmatpush.bf16.msra.mxu0 %v411
    %1225 = vmatpush.bf16.msra.mxu0 %v407
    %1226 = vmatpush.bf16.msra.mxu0 %v403
    %1227 = vmatmul.bf16.gmra.mxu0 %v1056
    %v1228 = vpop.f32.mrf.mxu0
    %v1229 = vadd.f32 0.0, %v1228
    %v1230 = vpop.f32.mrf.mxu0
    %1231 = vdwg.mxu0
    %v1232 = vadd.f32 %v280, %v1190
    %v1233 = vadd.f32 %v281, %v1203
    %v1234 = vadd.f32 %v282, %v1216
    %v1235 = vadd.f32 %v283, %v1229
    %v1236 = vmul.f32 %v1232, 0.5
    %v1237 = vmul.f32 %v1233, 0.5
    %v1238 = vmul.f32 %v1234, 0.5
    %v1239 = vtanh.pop %v1236
    %v1240 = vtanh.pop %v1237
    %v1241 = vtanh.pop %v1238
    %v1242 = vadd.f32 %v1239, 1.0
    %v1243 = vadd.f32 %v1240, 1.0
    %v1244 = vadd.f32 %v1241, 1.0
    %v1245 = vmul.f32 %v1242, 0.5
    %v1246 = vmul.f32 %v1243, 0.5
    %v1247 = vmul.f32 %v1244, 0.5
    %v1248 = vtanh.pop %v1235
    %v1249 = vmul.f32 %v1246, %v1053
    %v1250 = vmul.f32 %v1245, %v1248
    %v1251 = vadd.f32 %v1249, %v1250
    %v1252 = vtanh.pop %v1251
    %v1253 = vmul.f32 %v1247, %v1252
    %v1254 = vpack.c.bf16 %v1253, %v1253
    %v1255 = vpack.c.bf16 %v1179, %v1179
    %1256 = vmatpush.bf16.msra.mxu0 %v760
    %1257 = vmatpush.bf16.msra.mxu0 %v756
    %1258 = vmatpush.bf16.msra.mxu0 %v752
    %1259 = vmatpush.bf16.msra.mxu0 %v748
    %1260 = vmatpush.bf16.msra.mxu0 %v744
    %1261 = vmatpush.bf16.msra.mxu0 %v740
    %1262 = vmatpush.bf16.msra.mxu0 %v736
    %1263 = vmatpush.bf16.msra.mxu0 %v732
    %1264 = vmatmul.bf16.gmra.mxu0 %v1254
    %v1265 = vpop.f32.mrf.mxu0
    %v1266 = vadd.f32 %v164, %v1265
    %v1267 = vpop.f32.mrf.mxu0
    %1268 = vdwg.mxu0
    %1269 = vmatpush.bf16.msra.mxu0 %v792
    %1270 = vmatpush.bf16.msra.mxu0 %v788
    %1271 = vmatpush.bf16.msra.mxu0 %v784
    %1272 = vmatpush.bf16.msra.mxu0 %v780
    %1273 = vmatpush.bf16.msra.mxu0 %v776
    %1274 = vmatpush.bf16.msra.mxu0 %v772
    %1275 = vmatpush.bf16.msra.mxu0 %v768
    %1276 = vmatpush.bf16.msra.mxu0 %v764
    %1277 = vmatmul.bf16.gmra.mxu0 %v1255
    %v1278 = vpop.f32.mrf.mxu0
    %v1279 = vadd.f32 %v1266, %v1278
    %v1280 = vpop.f32.mrf.mxu0
    %1281 = vdwg.mxu0
    %1282 = vmatpush.bf16.msra.mxu0 %v761
    %1283 = vmatpush.bf16.msra.mxu0 %v757
    %1284 = vmatpush.bf16.msra.mxu0 %v753
    %1285 = vmatpush.bf16.msra.mxu0 %v749
    %1286 = vmatpush.bf16.msra.mxu0 %v745
    %1287 = vmatpush.bf16.msra.mxu0 %v741
    %1288 = vmatpush.bf16.msra.mxu0 %v737
    %1289 = vmatpush.bf16.msra.mxu0 %v733
    %1290 = vmatmul.bf16.gmra.mxu0 %v1254
    %v1291 = vpop.f32.mrf.mxu0
    %v1292 = vadd.f32 %v165, %v1291
    %v1293 = vpop.f32.mrf.mxu0
    %1294 = vdwg.mxu0
    %1295 = vmatpush.bf16.msra.mxu0 %v793
    %1296 = vmatpush.bf16.msra.mxu0 %v789
    %1297 = vmatpush.bf16.msra.mxu0 %v785
    %1298 = vmatpush.bf16.msra.mxu0 %v781
    %1299 = vmatpush.bf16.msra.mxu0 %v777
    %1300 = vmatpush.bf16.msra.mxu0 %v773
    %1301 = vmatpush.bf16.msra.mxu0 %v769
    %1302 = vmatpush.bf16.msra.mxu0 %v765
    %1303 = vmatmul.bf16.gmra.mxu0 %v1255
    %v1304 = vpop.f32.mrf.mxu0
    %v1305 = vadd.f32 %v1292, %v1304
    %v1306 = vpop.f32.mrf.mxu0
    %1307 = vdwg.mxu0
    %1308 = vmatpush.bf16.msra.mxu0 %v762
    %1309 = vmatpush.bf16.msra.mxu0 %v758
    %1310 = vmatpush.bf16.msra.mxu0 %v754
    %1311 = vmatpush.bf16.msra.mxu0 %v750
    %1312 = vmatpush.bf16.msra.mxu0 %v746
    %1313 = vmatpush.bf16.msra.mxu0 %v742
    %1314 = vmatpush.bf16.msra.mxu0 %v738
    %1315 = vmatpush.bf16.msra.mxu0 %v734
    %1316 = vmatmul.bf16.gmra.mxu0 %v1254
    %v1317 = vpop.f32.mrf.mxu0
    %v1318 = vadd.f32 %v166, %v1317
    %v1319 = vpop.f32.mrf.mxu0
    %1320 = vdwg.mxu0
    %1321 = vmatpush.bf16.msra.mxu0 %v794
    %1322 = vmatpush.bf16.msra.mxu0 %v790
    %1323 = vmatpush.bf16.msra.mxu0 %v786
    %1324 = vmatpush.bf16.msra.mxu0 %v782
    %1325 = vmatpush.bf16.msra.mxu0 %v778
    %1326 = vmatpush.bf16.msra.mxu0 %v774
    %1327 = vmatpush.bf16.msra.mxu0 %v770
    %1328 = vmatpush.bf16.msra.mxu0 %v766
    %1329 = vmatmul.bf16.gmra.mxu0 %v1255
    %v1330 = vpop.f32.mrf.mxu0
    %v1331 = vadd.f32 %v1318, %v1330
    %v1332 = vpop.f32.mrf.mxu0
    %1333 = vdwg.mxu0
    %1334 = vmatpush.bf16.msra.mxu0 %v763
    %1335 = vmatpush.bf16.msra.mxu0 %v759
    %1336 = vmatpush.bf16.msra.mxu0 %v755
    %1337 = vmatpush.bf16.msra.mxu0 %v751
    %1338 = vmatpush.bf16.msra.mxu0 %v747
    %1339 = vmatpush.bf16.msra.mxu0 %v743
    %1340 = vmatpush.bf16.msra.mxu0 %v739
    %1341 = vmatpush.bf16.msra.mxu0 %v735
    %1342 = vmatmul.bf16.gmra.mxu0 %v1254
    %v1343 = vpop.f32.mrf.mxu0
    %v1344 = vadd.f32 %v167, %v1343
    %v1345 = vpop.f32.mrf.mxu0
    %1346 = vdwg.mxu0
    %1347 = vmatpush.bf16.msra.mxu0 %v795
    %1348 = vmatpush.bf16.msra.mxu0 %v791
    %1349 = vmatpush.bf16.msra.mxu0 %v787
    %1350 = vmatpush.bf16.msra.mxu0 %v783
    %1351 = vmatpush.bf16.msra.mxu0 %v779
    %1352 = vmatpush.bf16.msra.mxu0 %v775
    %1353 = vmatpush.bf16.msra.mxu0 %v771
    %1354 = vmatpush.bf16.msra.mxu0 %v767
    %1355 = vmatmul.bf16.gmra.mxu0 %v1255
    %v1356 = vpop.f32.mrf.mxu0
    %v1357 = vadd.f32 %v1344, %v1356
    %v1358 = vpop.f32.mrf.mxu0
    %1359 = vdwg.mxu0
    %v1360 = vmul.f32 %v1279, 0.5
    %v1361 = vmul.f32 %v1305, 0.5
    %v1362 = vmul.f32 %v1331, 0.5
    %v1363 = vtanh.pop %v1360
    %v1364 = vtanh.pop %v1361
    %v1365 = vtanh.pop %v1362
    %v1366 = vadd.f32 %v1363, 1.0
    %v1367 = vadd.f32 %v1364, 1.0
    %v1368 = vadd.f32 %v1365, 1.0
    %v1369 = vmul.f32 %v1366, 0.5
    %v1370 = vmul.f32 %v1367, 0.5
    %v1371 = vmul.f32 %v1368, 0.5
    %v1372 = vtanh.pop %v1357
    %v1373 = vmul.f32 %v1370, %v1177
    %v1374 = vmul.f32 %v1369, %v1372
    %v1375 = vadd.f32 %v1373, %v1374
    %v1376 = vtanh.pop %v1375
    %v1377 = vmul.f32 %v1371, %v1376
    %1378 = vmatpush.bf16.msra.mxu0 %v428
    %1379 = vmatpush.bf16.msra.mxu0 %v424
    %1380 = vmatpush.bf16.msra.mxu0 %v420
    %1381 = vmatpush.bf16.msra.mxu0 %v416
    %1382 = vmatpush.bf16.msra.mxu0 %v412
    %1383 = vmatpush.bf16.msra.mxu0 %v408
    %1384 = vmatpush.bf16.msra.mxu0 %v404
    %1385 = vmatpush.bf16.msra.mxu0 %v400
    %1386 = vmatmul.bf16.gmra.mxu0 %v1254
    %v1387 = vpop.f32.mrf.mxu0
    %v1388 = vadd.f32 0.0, %v1387
    %v1389 = vpop.f32.mrf.mxu0
    %1390 = vdwg.mxu0
    %1391 = vmatpush.bf16.msra.mxu0 %v429
    %1392 = vmatpush.bf16.msra.mxu0 %v425
    %1393 = vmatpush.bf16.msra.mxu0 %v421
    %1394 = vmatpush.bf16.msra.mxu0 %v417
    %1395 = vmatpush.bf16.msra.mxu0 %v413
    %1396 = vmatpush.bf16.msra.mxu0 %v409
    %1397 = vmatpush.bf16.msra.mxu0 %v405
    %1398 = vmatpush.bf16.msra.mxu0 %v401
    %1399 = vmatmul.bf16.gmra.mxu0 %v1254
    %v1400 = vpop.f32.mrf.mxu0
    %v1401 = vadd.f32 0.0, %v1400
    %v1402 = vpop.f32.mrf.mxu0
    %1403 = vdwg.mxu0
    %1404 = vmatpush.bf16.msra.mxu0 %v430
    %1405 = vmatpush.bf16.msra.mxu0 %v426
    %1406 = vmatpush.bf16.msra.mxu0 %v422
    %1407 = vmatpush.bf16.msra.mxu0 %v418
    %1408 = vmatpush.bf16.msra.mxu0 %v414
    %1409 = vmatpush.bf16.msra.mxu0 %v410
    %1410 = vmatpush.bf16.msra.mxu0 %v406
    %1411 = vmatpush.bf16.msra.mxu0 %v402
    %1412 = vmatmul.bf16.gmra.mxu0 %v1254
    %v1413 = vpop.f32.mrf.mxu0
    %v1414 = vadd.f32 0.0, %v1413
    %v1415 = vpop.f32.mrf.mxu0
    %1416 = vdwg.mxu0
    %1417 = vmatpush.bf16.msra.mxu0 %v431
    %1418 = vmatpush.bf16.msra.mxu0 %v427
    %1419 = vmatpush.bf16.msra.mxu0 %v423
    %1420 = vmatpush.bf16.msra.mxu0 %v419
    %1421 = vmatpush.bf16.msra.mxu0 %v415
    %1422 = vmatpush.bf16.msra.mxu0 %v411
    %1423 = vmatpush.bf16.msra.mxu0 %v407
    %1424 = vmatpush.bf16.msra.mxu0 %v403
    %1425 = vmatmul.bf16.gmra.mxu0 %v1254
    %v1426 = vpop.f32.mrf.mxu0
    %v1427 = vadd.f32 0.0, %v1426
    %v1428 = vpop.f32.mrf.mxu0
    %1429 = vdwg.mxu0
    %v1430 = vadd.f32 %v284, %v1388
    %v1431 = vadd.f32 %v285, %v1401
    %v1432 = vadd.f32 %v286, %v1414
    %v1433 = vadd.f32 %v287, %v1427
    %v1434 = vmul.f32 %v1430, 0.5
    %v1435 = vmul.f32 %v1431, 0.5
    %v1436 = vmul.f32 %v1432, 0.5
    %v1437 = vtanh.pop %v1434
    %v1438 = vtanh.pop %v1435
    %v1439 = vtanh.pop %v1436
    %v1440 = vadd.f32 %v1437, 1.0
    %v1441 = vadd.f32 %v1438, 1.0
    %v1442 = vadd.f32 %v1439, 1.0
    %v1443 = vmul.f32 %v1440, 0.5
    %v1444 = vmul.f32 %v1441, 0.5
    %v1445 = vmul.f32 %v1442, 0.5
    %v1446 = vtanh.pop %v1433
    %v1447 = vmul.f32 %v1444, %v1251
    %v1448 = vmul.f32 %v1443, %v1446
    %v1449 = vadd.f32 %v1447, %v1448
    %v1450 = vtanh.pop %v1449
    %v1451 = vmul.f32 %v1445, %v1450
    %v1452 = vpack.c.bf16 %v1451, %v1451
    %v1453 = vpack.c.bf16 %v1377, %v1377
    %1454 = vmatpush.bf16.msra.mxu0 %v760
    %1455 = vmatpush.bf16.msra.mxu0 %v756
    %1456 = vmatpush.bf16.msra.mxu0 %v752
    %1457 = vmatpush.bf16.msra.mxu0 %v748
    %1458 = vmatpush.bf16.msra.mxu0 %v744
    %1459 = vmatpush.bf16.msra.mxu0 %v740
    %1460 = vmatpush.bf16.msra.mxu0 %v736
    %1461 = vmatpush.bf16.msra.mxu0 %v732
    %1462 = vmatmul.bf16.gmra.mxu0 %v1452
    %v1463 = vpop.f32.mrf.mxu0
    %v1464 = vadd.f32 %v164, %v1463
    %v1465 = vpop.f32.mrf.mxu0
    %1466 = vdwg.mxu0
    %1467 = vmatpush.bf16.msra.mxu0 %v792
    %1468 = vmatpush.bf16.msra.mxu0 %v788
    %1469 = vmatpush.bf16.msra.mxu0 %v784
    %1470 = vmatpush.bf16.msra.mxu0 %v780
    %1471 = vmatpush.bf16.msra.mxu0 %v776
    %1472 = vmatpush.bf16.msra.mxu0 %v772
    %1473 = vmatpush.bf16.msra.mxu0 %v768
    %1474 = vmatpush.bf16.msra.mxu0 %v764
    %1475 = vmatmul.bf16.gmra.mxu0 %v1453
    %v1476 = vpop.f32.mrf.mxu0
    %v1477 = vadd.f32 %v1464, %v1476
    %v1478 = vpop.f32.mrf.mxu0
    %1479 = vdwg.mxu0
    %1480 = vmatpush.bf16.msra.mxu0 %v761
    %1481 = vmatpush.bf16.msra.mxu0 %v757
    %1482 = vmatpush.bf16.msra.mxu0 %v753
    %1483 = vmatpush.bf16.msra.mxu0 %v749
    %1484 = vmatpush.bf16.msra.mxu0 %v745
    %1485 = vmatpush.bf16.msra.mxu0 %v741
    %1486 = vmatpush.bf16.msra.mxu0 %v737
    %1487 = vmatpush.bf16.msra.mxu0 %v733
    %1488 = vmatmul.bf16.gmra.mxu0 %v1452
    %v1489 = vpop.f32.mrf.mxu0
    %v1490 = vadd.f32 %v165, %v1489
    %v1491 = vpop.f32.mrf.mxu0
    %1492 = vdwg.mxu0
    %1493 = vmatpush.bf16.msra.mxu0 %v793
    %1494 = vmatpush.bf16.msra.mxu0 %v789
    %1495 = vmatpush.bf16.msra.mxu0 %v785
    %1496 = vmatpush.bf16.msra.mxu0 %v781
    %1497 = vmatpush.bf16.msra.mxu0 %v777
    %1498 = vmatpush.bf16.msra.mxu0 %v773
    %1499 = vmatpush.bf16.msra.mxu0 %v769
    %1500 = vmatpush.bf16.msra.mxu0 %v765
    %1501 = vmatmul.bf16.gmra.mxu0 %v1453
    %v1502 = vpop.f32.mrf.mxu0
    %v1503 = vadd.f32 %v1490, %v1502
    %v1504 = vpop.f32.mrf.mxu0
    %1505 = vdwg.mxu0
    %1506 = vmatpush.bf16.msra.mxu0 %v762
    %1507 = vmatpush.bf16.msra.mxu0 %v758
    %1508 = vmatpush.bf16.msra.mxu0 %v754
    %1509 = vmatpush.bf16.msra.mxu0 %v750
    %1510 = vmatpush.bf16.msra.mxu0 %v746
    %1511 = vmatpush.bf16.msra.mxu0 %v742
    %1512 = vmatpush.bf16.msra.mxu0 %v738
    %1513 = vmatpush.bf16.msra.mxu0 %v734
    %1514 = vmatmul.bf16.gmra.mxu0 %v1452
    %v1515 = vpop.f32.mrf.mxu0
    %v1516 = vadd.f32 %v166, %v1515
    %v1517 = vpop.f32.mrf.mxu0
    %1518 = vdwg.mxu0
    %1519 = vmatpush.bf16.msra.mxu0 %v794
    %1520 = vmatpush.bf16.msra.mxu0 %v790
    %1521 = vmatpush.bf16.msra.mxu0 %v786
    %1522 = vmatpush.bf16.msra.mxu0 %v782
    %1523 = vmatpush.bf16.msra.mxu0 %v778
    %1524 = vmatpush.bf16.msra.mxu0 %v774
    %1525 = vmatpush.bf16.msra.mxu0 %v770
    %1526 = vmatpush.bf16.msra.mxu0 %v766
    %1527 = vmatmul.bf16.gmra.mxu0 %v1453
    %v1528 = vpop.f32.mrf.mxu0
    %v1529 = vadd.f32 %v1516, %v1528
    %v1530 = vpop.f32.mrf.mxu0
    %1531 = vdwg.mxu0
    %1532 = vmatpush.bf16.msra.mxu0 %v763
    %1533 = vmatpush.bf16.msra.mxu0 %v759
    %1534 = vmatpush.bf16.msra.mxu0 %v755
    %1535 = vmatpush.bf16.msra.mxu0 %v751
    %1536 = vmatpush.bf16.msra.mxu0 %v747
    %1537 = vmatpush.bf16.msra.mxu0 %v743
    %1538 = vmatpush.bf16.msra.mxu0 %v739
    %1539 = vmatpush.bf16.msra.mxu0 %v735
    %1540 = vmatmul.bf16.gmra.mxu0 %v1452
    %v1541 = vpop.f32.mrf.mxu0
    %v1542 = vadd.f32 %v167, %v1541
    %v1543 = vpop.f32.mrf.mxu0
    %1544 = vdwg.mxu0
    %1545 = vmatpush.bf16.msra.mxu0 %v795
    %1546 = vmatpush.bf16.msra.mxu0 %v791
    %1547 = vmatpush.bf16.msra.mxu0 %v787
    %1548 = vmatpush.bf16.msra.mxu0 %v783
    %1549 = vmatpush.bf16.msra.mxu0 %v779
    %1550 = vmatpush.bf16.msra.mxu0 %v775
    %1551 = vmatpush.bf16.msra.mxu0 %v771
    %1552 = vmatpush.bf16.msra.mxu0 %v767
    %1553 = vmatmul.bf16.gmra.mxu0 %v1453
    %v1554 = vpop.f32.mrf.mxu0
    %v1555 = vadd.f32 %v1542, %v1554
    %v1556 = vpop.f32.mrf.mxu0
    %1557 = vdwg.mxu0
    %v1558 = vmul.f32 %v1477, 0.5
    %v1559 = vmul.f32 %v1503, 0.5
    %v1560 = vmul.f32 %v1529, 0.5
    %v1561 = vtanh.pop %v1558
    %v1562 = vtanh.pop %v1559
    %v1563 = vtanh.pop %v1560
    %v1564 = vadd.f32 %v1561, 1.0
    %v1565 = vadd.f32 %v1562, 1.0
    %v1566 = vadd.f32 %v1563, 1.0
    %v1567 = vmul.f32 %v1564, 0.5
    %v1568 = vmul.f32 %v1565, 0.5
    %v1569 = vmul.f32 %v1566, 0.5
    %v1570 = vtanh.pop %v1555
    %v1571 = vmul.f32 %v1568, %v1375
    %v1572 = vmul.f32 %v1567, %v1570
    %v1573 = vadd.f32 %v1571, %v1572
    %v1574 = vtanh.pop %v1573
    %v1575 = vmul.f32 %v1569, %v1574
    %1576 = vmatpush.bf16.msra.mxu0 %v428
    %1577 = vmatpush.bf16.msra.mxu0 %v424
    %1578 = vmatpush.bf16.msra.mxu0 %v420
    %1579 = vmatpush.bf16.msra.mxu0 %v416
    %1580 = vmatpush.bf16.msra.mxu0 %v412
    %1581 = vmatpush.bf16.msra.mxu0 %v408
    %1582 = vmatpush.bf16.msra.mxu0 %v404
    %1583 = vmatpush.bf16.msra.mxu0 %v400
    %1584 = vmatmul.bf16.gmra.mxu0 %v1452
    %v1585 = vpop.f32.mrf.mxu0
    %v1586 = vadd.f32 0.0, %v1585
    %v1587 = vpop.f32.mrf.mxu0
    %1588 = vdwg.mxu0
    %1589 = vmatpush.bf16.msra.mxu0 %v429
    %1590 = vmatpush.bf16.msra.mxu0 %v425
    %1591 = vmatpush.bf16.msra.mxu0 %v421
    %1592 = vmatpush.bf16.msra.mxu0 %v417
    %1593 = vmatpush.bf16.msra.mxu0 %v413
    %1594 = vmatpush.bf16.msra.mxu0 %v409
    %1595 = vmatpush.bf16.msra.mxu0 %v405
    %1596 = vmatpush.bf16.msra.mxu0 %v401
    %1597 = vmatmul.bf16.gmra.mxu0 %v1452
    %v1598 = vpop.f32.mrf.mxu0
    %v1599 = vadd.f32 0.0, %v1598
    %v1600 = vpop.f32.mrf.mxu0
    %1601 = vdwg.mxu0
    %1602 = vmatpush.bf16.msra.mxu0 %v430
    %1603 = vmatpush.bf16.msra.mxu0 %v426
    %1604 = vmatpush.bf16.msra.mxu0 %v422
    %1605 = vmatpush.bf16.msra.mxu0 %v418
    %1606 = vmatpush.bf16.msra.mxu0 %v414
    %1607 = vmatpush.bf16.msra.mxu0 %v410
    %1608 = vmatpush.bf16.msra.mxu0 %v406
    %1609 = vmatpush.bf16.msra.mxu0 %v402
    %1610 = vmatmul.bf16.gmra.mxu0 %v1452
    %v1611 = vpop.f32.mrf.mxu0
    %v1612 = vadd.f32 0.0, %v1611
    %v1613 = vpop.f32.mrf.mxu0
    %1614 = vdwg.mxu0
    %1615 = vmatpush.bf16.msra.mxu0 %v431
    %1616 = vmatpush.bf16.msra.mxu0 %v427
    %1617 = vmatpush.bf16.msra.mxu0 %v423
    %1618 = vmatpush.bf16.msra.mxu0 %v419
    %1619 = vmatpush.bf16.msra.mxu0 %v415
    %1620 = vmatpush.bf16.msra.mxu0 %v411
    %1621 = vmatpush.bf16.msra.mxu0 %v407
    %1622 = vmatpush.bf16.msra.mxu0 %v403
    %1623 = vmatmul.bf16.gmra.mxu0 %v1452
    %v1624 = vpop.f32.mrf.mxu0
    %v1625 = vadd.f32 0.0, %v1624
    %v1626 = vpop.f32.mrf.mxu0
    %1627 = vdwg.mxu0
    %v1628 = vadd.f32 %v288, %v1586
    %v1629 = vadd.f32 %v289, %v1599
    %v1630 = vadd.f32 %v290, %v1612
    %v1631 = vadd.f32 %v291, %v1625
    %v1632 = vmul.f32 %v1628, 0.5
    %v1633 = vmul.f32 %v1629, 0.5
    %v1634 = vmul.f32 %v1630, 0.5
    %v1635 = vtanh.pop %v1632
    %v1636 = vtanh.pop %v1633
    %v1637 = vtanh.pop %v1634
    %v1638 = vadd.f32 %v1635, 1.0
    %v1639 = vadd.f32 %v1636, 1.0
    %v1640 = vadd.f32 %v1637, 1.0
    %v1641 = vmul.f32 %v1638, 0.5
    %v1642 = vmul.f32 %v1639, 0.5
    %v1643 = vmul.f32 %v1640, 0.5
    %v1644 = vtanh.pop %v1631
    %v1645 = vmul.f32 %v1642, %v1449
    %v1646 = vmul.f32 %v1641, %v1644
    %v1647 = vadd.f32 %v1645, %v1646
    %v1648 = vtanh.pop %v1647
    %v1649 = vmul.f32 %v1643, %v1648
    %v1650 = vpack.c.bf16 %v1649, %v1649
    %v1651 = vpack.c.bf16 %v1575, %v1575
    %1652 = vmatpush.bf16.msra.mxu0 %v760
    %1653 = vmatpush.bf16.msra.mxu0 %v756
    %1654 = vmatpush.bf16.msra.mxu0 %v752
    %1655 = vmatpush.bf16.msra.mxu0 %v748
    %1656 = vmatpush.bf16.msra.mxu0 %v744
    %1657 = vmatpush.bf16.msra.mxu0 %v740
    %1658 = vmatpush.bf16.msra.mxu0 %v736
    %1659 = vmatpush.bf16.msra.mxu0 %v732
    %1660 = vmatmul.bf16.gmra.mxu0 %v1650
    %v1661 = vpop.f32.mrf.mxu0
    %v1662 = vadd.f32 %v164, %v1661
    %v1663 = vpop.f32.mrf.mxu0
    %1664 = vdwg.mxu0
    %1665 = vmatpush.bf16.msra.mxu0 %v792
    %1666 = vmatpush.bf16.msra.mxu0 %v788
    %1667 = vmatpush.bf16.msra.mxu0 %v784
    %1668 = vmatpush.bf16.msra.mxu0 %v780
    %1669 = vmatpush.bf16.msra.mxu0 %v776
    %1670 = vmatpush.bf16.msra.mxu0 %v772
    %1671 = vmatpush.bf16.msra.mxu0 %v768
    %1672 = vmatpush.bf16.msra.mxu0 %v764
    %1673 = vmatmul.bf16.gmra.mxu0 %v1651
    %v1674 = vpop.f32.mrf.mxu0
    %v1675 = vadd.f32 %v1662, %v1674
    %v1676 = vpop.f32.mrf.mxu0
    %1677 = vdwg.mxu0
    %1678 = vmatpush.bf16.msra.mxu0 %v761
    %1679 = vmatpush.bf16.msra.mxu0 %v757
    %1680 = vmatpush.bf16.msra.mxu0 %v753
    %1681 = vmatpush.bf16.msra.mxu0 %v749
    %1682 = vmatpush.bf16.msra.mxu0 %v745
    %1683 = vmatpush.bf16.msra.mxu0 %v741
    %1684 = vmatpush.bf16.msra.mxu0 %v737
    %1685 = vmatpush.bf16.msra.mxu0 %v733
    %1686 = vmatmul.bf16.gmra.mxu0 %v1650
    %v1687 = vpop.f32.mrf.mxu0
    %v1688 = vadd.f32 %v165, %v1687
    %v1689 = vpop.f32.mrf.mxu0
    %1690 = vdwg.mxu0
    %1691 = vmatpush.bf16.msra.mxu0 %v793
    %1692 = vmatpush.bf16.msra.mxu0 %v789
    %1693 = vmatpush.bf16.msra.mxu0 %v785
    %1694 = vmatpush.bf16.msra.mxu0 %v781
    %1695 = vmatpush.bf16.msra.mxu0 %v777
    %1696 = vmatpush.bf16.msra.mxu0 %v773
    %1697 = vmatpush.bf16.msra.mxu0 %v769
    %1698 = vmatpush.bf16.msra.mxu0 %v765
    %1699 = vmatmul.bf16.gmra.mxu0 %v1651
    %v1700 = vpop.f32.mrf.mxu0
    %v1701 = vadd.f32 %v1688, %v1700
    %v1702 = vpop.f32.mrf.mxu0
    %1703 = vdwg.mxu0
    %1704 = vmatpush.bf16.msra.mxu0 %v762
    %1705 = vmatpush.bf16.msra.mxu0 %v758
    %1706 = vmatpush.bf16.msra.mxu0 %v754
    %1707 = vmatpush.bf16.msra.mxu0 %v750
    %1708 = vmatpush.bf16.msra.mxu0 %v746
    %1709 = vmatpush.bf16.msra.mxu0 %v742
    %1710 = vmatpush.bf16.msra.mxu0 %v738
    %1711 = vmatpush.bf16.msra.mxu0 %v734
    %1712 = vmatmul.bf16.gmra.mxu0 %v1650
    %v1713 = vpop.f32.mrf.mxu0
    %v1714 = vadd.f32 %v166, %v1713
    %v1715 = vpop.f32.mrf.mxu0
    %1716 = vdwg.mxu0
    %1717 = vmatpush.bf16.msra.mxu0 %v794
    %1718 = vmatpush.bf16.msra.mxu0 %v790
    %1719 = vmatpush.bf16.msra.mxu0 %v786
    %1720 = vmatpush.bf16.msra.mxu0 %v782
    %1721 = vmatpush.bf16.msra.mxu0 %v778
    %1722 = vmatpush.bf16.msra.mxu0 %v774
    %1723 = vmatpush.bf16.msra.mxu0 %v770
    %1724 = vmatpush.bf16.msra.mxu0 %v766
    %1725 = vmatmul.bf16.gmra.mxu0 %v1651
    %v1726 = vpop.f32.mrf.mxu0
    %v1727 = vadd.f32 %v1714, %v1726
    %v1728 = vpop.f32.mrf.mxu0
    %1729 = vdwg.mxu0
    %1730 = vmatpush.bf16.msra.mxu0 %v763
    %1731 = vmatpush.bf16.msra.mxu0 %v759
    %1732 = vmatpush.bf16.msra.mxu0 %v755
    %1733 = vmatpush.bf16.msra.mxu0 %v751
    %1734 = vmatpush.bf16.msra.mxu0 %v747
    %1735 = vmatpush.bf16.msra.mxu0 %v743
    %1736 = vmatpush.bf16.msra.mxu0 %v739
    %1737 = vmatpush.bf16.msra.mxu0 %v735
    %1738 = vmatmul.bf16.gmra.mxu0 %v1650
    %v1739 = vpop.f32.mrf.mxu0
    %v1740 = vadd.f32 %v167, %v1739
    %v1741 = vpop.f32.mrf.mxu0
    %1742 = vdwg.mxu0
    %1743 = vmatpush.bf16.msra.mxu0 %v795
    %1744 = vmatpush.bf16.msra.mxu0 %v791
    %1745 = vmatpush.bf16.msra.mxu0 %v787
    %1746 = vmatpush.bf16.msra.mxu0 %v783
    %1747 = vmatpush.bf16.msra.mxu0 %v779
    %1748 = vmatpush.bf16.msra.mxu0 %v775
    %1749 = vmatpush.bf16.msra.mxu0 %v771
    %1750 = vmatpush.bf16.msra.mxu0 %v767
    %1751 = vmatmul.bf16.gmra.mxu0 %v1651
    %v1752 = vpop.f32.mrf.mxu0
    %v1753 = vadd.f32 %v1740, %v1752
    %v1754 = vpop.f32.mrf.mxu0
    %1755 = vdwg.mxu0
    %v1756 = vmul.f32 %v1675, 0.5
    %v1757 = vmul.f32 %v1701, 0.5
    %v1758 = vmul.f32 %v1727, 0.5
    %v1759 = vtanh.pop %v1756
    %v1760 = vtanh.pop %v1757
    %v1761 = vtanh.pop %v1758
    %v1762 = vadd.f32 %v1759, 1.0
    %v1763 = vadd.f32 %v1760, 1.0
    %v1764 = vadd.f32 %v1761, 1.0
    %v1765 = vmul.f32 %v1762, 0.5
    %v1766 = vmul.f32 %v1763, 0.5
    %v1767 = vmul.f32 %v1764, 0.5
    %v1768 = vtanh.pop %v1753
    %v1769 = vmul.f32 %v1766, %v1573
    %v1770 = vmul.f32 %v1765, %v1768
    %v1771 = vadd.f32 %v1769, %v1770
    %v1772 = vtanh.pop %v1771
    %v1773 = vmul.f32 %v1767, %v1772
    %1774 = vmatpush.bf16.msra.mxu0 %v428
    %1775 = vmatpush.bf16.msra.mxu0 %v424
    %1776 = vmatpush.bf16.msra.mxu0 %v420
    %1777 = vmatpush.bf16.msra.mxu0 %v416
    %1778 = vmatpush.bf16.msra.mxu0 %v412
    %1779 = vmatpush.bf16.msra.mxu0 %v408
    %1780 = vmatpush.bf16.msra.mxu0 %v404
    %1781 = vmatpush.bf16.msra.mxu0 %v400
    %1782 = vmatmul.bf16.gmra.mxu0 %v1650
    %v1783 = vpop.f32.mrf.mxu0
    %v1784 = vadd.f32 0.0, %v1783
    %v1785 = vpop.f32.mrf.mxu0
    %1786 = vdwg.mxu0
    %1787 = vmatpush.bf16.msra.mxu0 %v429
    %1788 = vmatpush.bf16.msra.mxu0 %v425
    %1789 = vmatpush.bf16.msra.mxu0 %v421
    %1790 = vmatpush.bf16.msra.mxu0 %v417
    %1791 = vmatpush.bf16.msra.mxu0 %v413
    %1792 = vmatpush.bf16.msra.mxu0 %v409
    %1793 = vmatpush.bf16.msra.mxu0 %v405
    %1794 = vmatpush.bf16.msra.mxu0 %v401
    %1795 = vmatmul.bf16.gmra.mxu0 %v1650
    %v1796 = vpop.f32.mrf.mxu0
    %v1797 = vadd.f32 0.0, %v1796
    %v1798 = vpop.f32.mrf.mxu0
    %1799 = vdwg.mxu0
    %1800 = vmatpush.bf16.msra.mxu0 %v430
    %1801 = vmatpush.bf16.msra.mxu0 %v426
    %1802 = vmatpush.bf16.msra.mxu0 %v422
    %1803 = vmatpush.bf16.msra.mxu0 %v418
    %1804 = vmatpush.bf16.msra.mxu0 %v414
    %1805 = vmatpush.bf16.msra.mxu0 %v410
    %1806 = vmatpush.bf16.msra.mxu0 %v406
    %1807 = vmatpush.bf16.msra.mxu0 %v402
    %1808 = vmatmul.bf16.gmra.mxu0 %v1650
    %v1809 = vpop.f32.mrf.mxu0
    %v1810 = vadd.f32 0.0, %v1809
    %v1811 = vpop.f32.mrf.mxu0
    %1812 = vdwg.mxu0
    %1813 = vmatpush.bf16.msra.mxu0 %v431
    %1814 = vmatpush.bf16.msra.mxu0 %v427
    %1815 = vmatpush.bf16.msra.mxu0 %v423
    %1816 = vmatpush.bf16.msra.mxu0 %v419
    %1817 = vmatpush.bf16.msra.mxu0 %v415
    %1818 = vmatpush.bf16.msra.mxu0 %v411
    %1819 = vmatpush.bf16.msra.mxu0 %v407
    %1820 = vmatpush.bf16.msra.mxu0 %v403
    %1821 = vmatmul.bf16.gmra.mxu0 %v1650
    %v1822 = vpop.f32.mrf.mxu0
    %v1823 = vadd.f32 0.0, %v1822
    %v1824 = vpop.f32.mrf.mxu0
    %1825 = vdwg.mxu0
    %v1826 = vadd.f32 %v292, %v1784
    %v1827 = vadd.f32 %v293, %v1797
    %v1828 = vadd.f32 %v294, %v1810
    %v1829 = vadd.f32 %v295, %v1823
    %v1830 = vmul.f32 %v1826, 0.5
    %v1831 = vmul.f32 %v1827, 0.5
    %v1832 = vmul.f32 %v1828, 0.5
    %v1833 = vtanh.pop %v1830
    %v1834 = vtanh.pop %v1831
    %v1835 = vtanh.pop %v1832
    %v1836 = vadd.f32 %v1833, 1.0
    %v1837 = vadd.f32 %v1834, 1.0
    %v1838 = vadd.f32 %v1835, 1.0
    %v1839 = vmul.f32 %v1836, 0.5
    %v1840 = vmul.f32 %v1837, 0.5
    %v1841 = vmul.f32 %v1838, 0.5
    %v1842 = vtanh.pop %v1829
    %v1843 = vmul.f32 %v1840, %v1647
    %v1844 = vmul.f32 %v1839, %v1842
    %v1845 = vadd.f32 %v1843, %v1844
    %v1846 = vtanh.pop %v1845
    %v1847 = vmul.f32 %v1841, %v1846
    %v1848 = vpack.c.bf16 %v1847, %v1847
    %v1849 = vpack.c.bf16 %v1773, %v1773
    %1850 = vmatpush.bf16.msra.mxu0 %v760
    %1851 = vmatpush.bf16.msra.mxu0 %v756
    %1852 = vmatpush.bf16.msra.mxu0 %v752
    %1853 = vmatpush.bf16.msra.mxu0 %v748
    %1854 = vmatpush.bf16.msra.mxu0 %v744
    %1855 = vmatpush.bf16.msra.mxu0 %v740
    %1856 = vmatpush.bf16.msra.mxu0 %v736
    %1857 = vmatpush.bf16.msra.mxu0 %v732
    %1858 = vmatmul.bf16.gmra.mxu0 %v1848
    %v1859 = vpop.f32.mrf.mxu0
    %v1860 = vadd.f32 %v164, %v1859
    %v1861 = vpop.f32.mrf.mxu0
    %1862 = vdwg.mxu0
    %1863 = vmatpush.bf16.msra.mxu0 %v792
    %1864 = vmatpush.bf16.msra.mxu0 %v788
    %1865 = vmatpush.bf16.msra.mxu0 %v784
    %1866 = vmatpush.bf16.msra.mxu0 %v780
    %1867 = vmatpush.bf16.msra.mxu0 %v776
    %1868 = vmatpush.bf16.msra.mxu0 %v772
    %1869 = vmatpush.bf16.msra.mxu0 %v768
    %1870 = vmatpush.bf16.msra.mxu0 %v764
    %1871 = vmatmul.bf16.gmra.mxu0 %v1849
    %v1872 = vpop.f32.mrf.mxu0
    %v1873 = vadd.f32 %v1860, %v1872
    %v1874 = vpop.f32.mrf.mxu0
    %1875 = vdwg.mxu0
    %1876 = vmatpush.bf16.msra.mxu0 %v761
    %1877 = vmatpush.bf16.msra.mxu0 %v757
    %1878 = vmatpush.bf16.msra.mxu0 %v753
    %1879 = vmatpush.bf16.msra.mxu0 %v749
    %1880 = vmatpush.bf16.msra.mxu0 %v745
    %1881 = vmatpush.bf16.msra.mxu0 %v741
    %1882 = vmatpush.bf16.msra.mxu0 %v737
    %1883 = vmatpush.bf16.msra.mxu0 %v733
    %1884 = vmatmul.bf16.gmra.mxu0 %v1848
    %v1885 = vpop.f32.mrf.mxu0
    %v1886 = vadd.f32 %v165, %v1885
    %v1887 = vpop.f32.mrf.mxu0
    %1888 = vdwg.mxu0
    %1889 = vmatpush.bf16.msra.mxu0 %v793
    %1890 = vmatpush.bf16.msra.mxu0 %v789
    %1891 = vmatpush.bf16.msra.mxu0 %v785
    %1892 = vmatpush.bf16.msra.mxu0 %v781
    %1893 = vmatpush.bf16.msra.mxu0 %v777
    %1894 = vmatpush.bf16.msra.mxu0 %v773
    %1895 = vmatpush.bf16.msra.mxu0 %v769
    %1896 = vmatpush.bf16.msra.mxu0 %v765
    %1897 = vmatmul.bf16.gmra.mxu0 %v1849
    %v1898 = vpop.f32.mrf.mxu0
    %v1899 = vadd.f32 %v1886, %v1898
    %v1900 = vpop.f32.mrf.mxu0
    %1901 = vdwg.mxu0
    %1902 = vmatpush.bf16.msra.mxu0 %v762
    %1903 = vmatpush.bf16.msra.mxu0 %v758
    %1904 = vmatpush.bf16.msra.mxu0 %v754
    %1905 = vmatpush.bf16.msra.mxu0 %v750
    %1906 = vmatpush.bf16.msra.mxu0 %v746
    %1907 = vmatpush.bf16.msra.mxu0 %v742
    %1908 = vmatpush.bf16.msra.mxu0 %v738
    %1909 = vmatpush.bf16.msra.mxu0 %v734
    %1910 = vmatmul.bf16.gmra.mxu0 %v1848
    %v1911 = vpop.f32.mrf.mxu0
    %v1912 = vadd.f32 %v166, %v1911
    %v1913 = vpop.f32.mrf.mxu0
    %1914 = vdwg.mxu0
    %1915 = vmatpush.bf16.msra.mxu0 %v794
    %1916 = vmatpush.bf16.msra.mxu0 %v790
    %1917 = vmatpush.bf16.msra.mxu0 %v786
    %1918 = vmatpush.bf16.msra.mxu0 %v782
    %1919 = vmatpush.bf16.msra.mxu0 %v778
    %1920 = vmatpush.bf16.msra.mxu0 %v774
    %1921 = vmatpush.bf16.msra.mxu0 %v770
    %1922 = vmatpush.bf16.msra.mxu0 %v766
    %1923 = vmatmul.bf16.gmra.mxu0 %v1849
    %v1924 = vpop.f32.mrf.mxu0
    %v1925 = vadd.f32 %v1912, %v1924
    %v1926 = vpop.f32.mrf.mxu0
    %1927 = vdwg.mxu0
    %1928 = vmatpush.bf16.msra.mxu0 %v763
    %1929 = vmatpush.bf16.msra.mxu0 %v759
    %1930 = vmatpush.bf16.msra.mxu0 %v755
    %1931 = vmatpush.bf16.msra.mxu0 %v751
    %1932 = vmatpush.bf16.msra.mxu0 %v747
    %1933 = vmatpush.bf16.msra.mxu0 %v743
    %1934 = vmatpush.bf16.msra.mxu0 %v739
    %1935 = vmatpush.bf16.msra.mxu0 %v735
    %1936 = vmatmul.bf16.gmra.mxu0 %v1848
    %v1937 = vpop.f32.mrf.mxu0
    %v1938 = vadd.f32 %v167, %v1937
    %v1939 = vpop.f32.mrf.mxu0
    %1940 = vdwg.mxu0
    %1941 = vmatpush.bf16.msra.mxu0 %v795
    %1942 = vmatpush.bf16.msra.mxu0 %v791
    %1943 = vmatpush.bf16.msra.mxu0 %v787
    %1944 = vmatpush.bf16.msra.mxu0 %v783
    %1945 = vmatpush.bf16.msra.mxu0 %v779
    %1946 = vmatpush.bf16.msra.mxu0 %v775
    %1947 = vmatpush.bf16.msra.mxu0 %v771
    %1948 = vmatpush.bf16.msra.mxu0 %v767
    %1949 = vmatmul.bf16.gmra.mxu0 %v1849
    %v1950 = vpop.f32.mrf.mxu0
    %v1951 = vadd.f32 %v1938, %v1950
    %v1952 = vpop.f32.mrf.mxu0
    %1953 = vdwg.mxu0
    %v1954 = vmul.f32 %v1873, 0.5
    %v1955 = vmul.f32 %v1899, 0.5
    %v1956 = vmul.f32 %v1925, 0.5
    %v1957 = vtanh.pop %v1954
    %v1958 = vtanh.pop %v1955
    %v1959 = vtanh.pop %v1956
    %v1960 = vadd.f32 %v1957, 1.0
    %v1961 = vadd.f32 %v1958, 1.0
    %v1962 = vadd.f32 %v1959, 1.0
    %v1963 = vmul.f32 %v1960, 0.5
    %v1964 = vmul.f32 %v1961, 0.5
    %v1965 = vmul.f32 %v1962, 0.5
    %v1966 = vtanh.pop %v1951
    %v1967 = vmul.f32 %v1964, %v1771
    %v1968 = vmul.f32 %v1963, %v1966
    %v1969 = vadd.f32 %v1967, %v1968
    %v1970 = vtanh.pop %v1969
    %v1971 = vmul.f32 %v1965, %v1970
    %1972 = vmatpush.bf16.msra.mxu0 %v428
    %1973 = vmatpush.bf16.msra.mxu0 %v424
    %1974 = vmatpush.bf16.msra.mxu0 %v420
    %1975 = vmatpush.bf16.msra.mxu0 %v416
    %1976 = vmatpush.bf16.msra.mxu0 %v412
    %1977 = vmatpush.bf16.msra.mxu0 %v408
    %1978 = vmatpush.bf16.msra.mxu0 %v404
    %1979 = vmatpush.bf16.msra.mxu0 %v400
    %1980 = vmatmul.bf16.gmra.mxu0 %v1848
    %v1981 = vpop.f32.mrf.mxu0
    %v1982 = vadd.f32 0.0, %v1981
    %v1983 = vpop.f32.mrf.mxu0
    %1984 = vdwg.mxu0
    %1985 = vmatpush.bf16.msra.mxu0 %v429
    %1986 = vmatpush.bf16.msra.mxu0 %v425
    %1987 = vmatpush.bf16.msra.mxu0 %v421
    %1988 = vmatpush.bf16.msra.mxu0 %v417
    %1989 = vmatpush.bf16.msra.mxu0 %v413
    %1990 = vmatpush.bf16.msra.mxu0 %v409
    %1991 = vmatpush.bf16.msra.mxu0 %v405
    %1992 = vmatpush.bf16.msra.mxu0 %v401
    %1993 = vmatmul.bf16.gmra.mxu0 %v1848
    %v1994 = vpop.f32.mrf.mxu0
    %v1995 = vadd.f32 0.0, %v1994
    %v1996 = vpop.f32.mrf.mxu0
    %1997 = vdwg.mxu0
    %1998 = vmatpush.bf16.msra.mxu0 %v430
    %1999 = vmatpush.bf16.msra.mxu0 %v426
    %2000 = vmatpush.bf16.msra.mxu0 %v422
    %2001 = vmatpush.bf16.msra.mxu0 %v418
    %2002 = vmatpush.bf16.msra.mxu0 %v414
    %2003 = vmatpush.bf16.msra.mxu0 %v410
    %2004 = vmatpush.bf16.msra.mxu0 %v406
    %2005 = vmatpush.bf16.msra.mxu0 %v402
    %2006 = vmatmul.bf16.gmra.mxu0 %v1848
    %v2007 = vpop.f32.mrf.mxu0
    %v2008 = vadd.f32 0.0, %v2007
    %v2009 = vpop.f32.mrf.mxu0
    %2010 = vdwg.mxu0
    %2011 = vmatpush.bf16.msra.mxu0 %v431
    %2012 = vmatpush.bf16.msra.mxu0 %v427
    %2013 = vmatpush.bf16.msra.mxu0 %v423
    %2014 = vmatpush.bf16.msra.mxu0 %v419
    %2015 = vmatpush.bf16.msra.mxu0 %v415
    %2016 = vmatpush.bf16.msra.mxu0 %v411
    %2017 = vmatpush.bf16.msra.mxu0 %v407
    %2018 = vmatpush.bf16.msra.mxu0 %v403
    %2019 = vmatmul.bf16.gmra.mxu0 %v1848
    %v2020 = vpop.f32.mrf.mxu0
    %v2021 = vadd.f32 0.0, %v2020
    %v2022 = vpop.f32.mrf.mxu0
    %2023 = vdwg.mxu0
    %v2024 = vadd.f32 %v296, %v1982
    %v2025 = vadd.f32 %v297, %v1995
    %v2026 = vadd.f32 %v298, %v2008
    %v2027 = vadd.f32 %v299, %v2021
    %v2028 = vmul.f32 %v2024, 0.5
    %v2029 = vmul.f32 %v2025, 0.5
    %v2030 = vmul.f32 %v2026, 0.5
    %v2031 = vtanh.pop %v2028
    %v2032 = vtanh.pop %v2029
    %v2033 = vtanh.pop %v2030
    %v2034 = vadd.f32 %v2031, 1.0
    %v2035 = vadd.f32 %v2032, 1.0
    %v2036 = vadd.f32 %v2033, 1.0
    %v2037 = vmul.f32 %v2034, 0.5
    %v2038 = vmul.f32 %v2035, 0.5
    %v2039 = vmul.f32 %v2036, 0.5
    %v2040 = vtanh.pop %v2027
    %v2041 = vmul.f32 %v2038, %v1845
    %v2042 = vmul.f32 %v2037, %v2040
    %v2043 = vadd.f32 %v2041, %v2042
    %v2044 = vtanh.pop %v2043
    %v2045 = vmul.f32 %v2039, %v2044
    %v2046 = vpack.c.bf16 %v2045, %v2045
    %v2047 = vpack.c.bf16 %v1971, %v1971
    %2048 = vmatpush.bf16.msra.mxu0 %v760
    %2049 = vmatpush.bf16.msra.mxu0 %v756
    %2050 = vmatpush.bf16.msra.mxu0 %v752
    %2051 = vmatpush.bf16.msra.mxu0 %v748
    %2052 = vmatpush.bf16.msra.mxu0 %v744
    %2053 = vmatpush.bf16.msra.mxu0 %v740
    %2054 = vmatpush.bf16.msra.mxu0 %v736
    %2055 = vmatpush.bf16.msra.mxu0 %v732
    %2056 = vmatmul.bf16.gmra.mxu0 %v2046
    %v2057 = vpop.f32.mrf.mxu0
    %v2058 = vadd.f32 %v164, %v2057
    %v2059 = vpop.f32.mrf.mxu0
    %2060 = vdwg.mxu0
    %2061 = vmatpush.bf16.msra.mxu0 %v792
    %2062 = vmatpush.bf16.msra.mxu0 %v788
    %2063 = vmatpush.bf16.msra.mxu0 %v784
    %2064 = vmatpush.bf16.msra.mxu0 %v780
    %2065 = vmatpush.bf16.msra.mxu0 %v776
    %2066 = vmatpush.bf16.msra.mxu0 %v772
    %2067 = vmatpush.bf16.msra.mxu0 %v768
    %2068 = vmatpush.bf16.msra.mxu0 %v764
    %2069 = vmatmul.bf16.gmra.mxu0 %v2047
    %v2070 = vpop.f32.mrf.mxu0
    %v2071 = vadd.f32 %v2058, %v2070
    %v2072 = vpop.f32.mrf.mxu0
    %2073 = vdwg.mxu0
    %2074 = vmatpush.bf16.msra.mxu0 %v761
    %2075 = vmatpush.bf16.msra.mxu0 %v757
    %2076 = vmatpush.bf16.msra.mxu0 %v753
    %2077 = vmatpush.bf16.msra.mxu0 %v749
    %2078 = vmatpush.bf16.msra.mxu0 %v745
    %2079 = vmatpush.bf16.msra.mxu0 %v741
    %2080 = vmatpush.bf16.msra.mxu0 %v737
    %2081 = vmatpush.bf16.msra.mxu0 %v733
    %2082 = vmatmul.bf16.gmra.mxu0 %v2046
    %v2083 = vpop.f32.mrf.mxu0
    %v2084 = vadd.f32 %v165, %v2083
    %v2085 = vpop.f32.mrf.mxu0
    %2086 = vdwg.mxu0
    %2087 = vmatpush.bf16.msra.mxu0 %v793
    %2088 = vmatpush.bf16.msra.mxu0 %v789
    %2089 = vmatpush.bf16.msra.mxu0 %v785
    %2090 = vmatpush.bf16.msra.mxu0 %v781
    %2091 = vmatpush.bf16.msra.mxu0 %v777
    %2092 = vmatpush.bf16.msra.mxu0 %v773
    %2093 = vmatpush.bf16.msra.mxu0 %v769
    %2094 = vmatpush.bf16.msra.mxu0 %v765
    %2095 = vmatmul.bf16.gmra.mxu0 %v2047
    %v2096 = vpop.f32.mrf.mxu0
    %v2097 = vadd.f32 %v2084, %v2096
    %v2098 = vpop.f32.mrf.mxu0
    %2099 = vdwg.mxu0
    %2100 = vmatpush.bf16.msra.mxu0 %v762
    %2101 = vmatpush.bf16.msra.mxu0 %v758
    %2102 = vmatpush.bf16.msra.mxu0 %v754
    %2103 = vmatpush.bf16.msra.mxu0 %v750
    %2104 = vmatpush.bf16.msra.mxu0 %v746
    %2105 = vmatpush.bf16.msra.mxu0 %v742
    %2106 = vmatpush.bf16.msra.mxu0 %v738
    %2107 = vmatpush.bf16.msra.mxu0 %v734
    %2108 = vmatmul.bf16.gmra.mxu0 %v2046
    %v2109 = vpop.f32.mrf.mxu0
    %v2110 = vadd.f32 %v166, %v2109
    %v2111 = vpop.f32.mrf.mxu0
    %2112 = vdwg.mxu0
    %2113 = vmatpush.bf16.msra.mxu0 %v794
    %2114 = vmatpush.bf16.msra.mxu0 %v790
    %2115 = vmatpush.bf16.msra.mxu0 %v786
    %2116 = vmatpush.bf16.msra.mxu0 %v782
    %2117 = vmatpush.bf16.msra.mxu0 %v778
    %2118 = vmatpush.bf16.msra.mxu0 %v774
    %2119 = vmatpush.bf16.msra.mxu0 %v770
    %2120 = vmatpush.bf16.msra.mxu0 %v766
    %2121 = vmatmul.bf16.gmra.mxu0 %v2047
    %v2122 = vpop.f32.mrf.mxu0
    %v2123 = vadd.f32 %v2110, %v2122
    %v2124 = vpop.f32.mrf.mxu0
    %2125 = vdwg.mxu0
    %2126 = vmatpush.bf16.msra.mxu0 %v763
    %2127 = vmatpush.bf16.msra.mxu0 %v759
    %2128 = vmatpush.bf16.msra.mxu0 %v755
    %2129 = vmatpush.bf16.msra.mxu0 %v751
    %2130 = vmatpush.bf16.msra.mxu0 %v747
    %2131 = vmatpush.bf16.msra.mxu0 %v743
    %2132 = vmatpush.bf16.msra.mxu0 %v739
    %2133 = vmatpush.bf16.msra.mxu0 %v735
    %2134 = vmatmul.bf16.gmra.mxu0 %v2046
    %v2135 = vpop.f32.mrf.mxu0
    %v2136 = vadd.f32 %v167, %v2135
    %v2137 = vpop.f32.mrf.mxu0
    %2138 = vdwg.mxu0
    %2139 = vmatpush.bf16.msra.mxu0 %v795
    %2140 = vmatpush.bf16.msra.mxu0 %v791
    %2141 = vmatpush.bf16.msra.mxu0 %v787
    %2142 = vmatpush.bf16.msra.mxu0 %v783
    %2143 = vmatpush.bf16.msra.mxu0 %v779
    %2144 = vmatpush.bf16.msra.mxu0 %v775
    %2145 = vmatpush.bf16.msra.mxu0 %v771
    %2146 = vmatpush.bf16.msra.mxu0 %v767
    %2147 = vmatmul.bf16.gmra.mxu0 %v2047
    %v2148 = vpop.f32.mrf.mxu0
    %v2149 = vadd.f32 %v2136, %v2148
    %v2150 = vpop.f32.mrf.mxu0
    %2151 = vdwg.mxu0
    %v2152 = vmul.f32 %v2071, 0.5
    %v2153 = vmul.f32 %v2097, 0.5
    %v2154 = vmul.f32 %v2123, 0.5
    %v2155 = vtanh.pop %v2152
    %v2156 = vtanh.pop %v2153
    %v2157 = vtanh.pop %v2154
    %v2158 = vadd.f32 %v2155, 1.0
    %v2159 = vadd.f32 %v2156, 1.0
    %v2160 = vadd.f32 %v2157, 1.0
    %v2161 = vmul.f32 %v2158, 0.5
    %v2162 = vmul.f32 %v2159, 0.5
    %v2163 = vmul.f32 %v2160, 0.5
    %v2164 = vtanh.pop %v2149
    %v2165 = vmul.f32 %v2162, %v1969
    %v2166 = vmul.f32 %v2161, %v2164
    %v2167 = vadd.f32 %v2165, %v2166
    %v2168 = vtanh.pop %v2167
    %v2169 = vmul.f32 %v2163, %v2168
    %2170 = vmatpush.bf16.msra.mxu0 %v428
    %2171 = vmatpush.bf16.msra.mxu0 %v424
    %2172 = vmatpush.bf16.msra.mxu0 %v420
    %2173 = vmatpush.bf16.msra.mxu0 %v416
    %2174 = vmatpush.bf16.msra.mxu0 %v412
    %2175 = vmatpush.bf16.msra.mxu0 %v408
    %2176 = vmatpush.bf16.msra.mxu0 %v404
    %2177 = vmatpush.bf16.msra.mxu0 %v400
    %2178 = vmatmul.bf16.gmra.mxu0 %v2046
    %v2179 = vpop.f32.mrf.mxu0
    %v2180 = vadd.f32 0.0, %v2179
    %v2181 = vpop.f32.mrf.mxu0
    %2182 = vdwg.mxu0
    %2183 = vmatpush.bf16.msra.mxu0 %v429
    %2184 = vmatpush.bf16.msra.mxu0 %v425
    %2185 = vmatpush.bf16.msra.mxu0 %v421
    %2186 = vmatpush.bf16.msra.mxu0 %v417
    %2187 = vmatpush.bf16.msra.mxu0 %v413
    %2188 = vmatpush.bf16.msra.mxu0 %v409
    %2189 = vmatpush.bf16.msra.mxu0 %v405
    %2190 = vmatpush.bf16.msra.mxu0 %v401
    %2191 = vmatmul.bf16.gmra.mxu0 %v2046
    %v2192 = vpop.f32.mrf.mxu0
    %v2193 = vadd.f32 0.0, %v2192
    %v2194 = vpop.f32.mrf.mxu0
    %2195 = vdwg.mxu0
    %2196 = vmatpush.bf16.msra.mxu0 %v430
    %2197 = vmatpush.bf16.msra.mxu0 %v426
    %2198 = vmatpush.bf16.msra.mxu0 %v422
    %2199 = vmatpush.bf16.msra.mxu0 %v418
    %2200 = vmatpush.bf16.msra.mxu0 %v414
    %2201 = vmatpush.bf16.msra.mxu0 %v410
    %2202 = vmatpush.bf16.msra.mxu0 %v406
    %2203 = vmatpush.bf16.msra.mxu0 %v402
    %2204 = vmatmul.bf16.gmra.mxu0 %v2046
    %v2205 = vpop.f32.mrf.mxu0
    %v2206 = vadd.f32 0.0, %v2205
    %v2207 = vpop.f32.mrf.mxu0
    %2208 = vdwg.mxu0
    %2209 = vmatpush.bf16.msra.mxu0 %v431
    %2210 = vmatpush.bf16.msra.mxu0 %v427
    %2211 = vmatpush.bf16.msra.mxu0 %v423
    %2212 = vmatpush.bf16.msra.mxu0 %v419
    %2213 = vmatpush.bf16.msra.mxu0 %v415
    %2214 = vmatpush.bf16.msra.mxu0 %v411
    %2215 = vmatpush.bf16.msra.mxu0 %v407
    %2216 = vmatpush.bf16.msra.mxu0 %v403
    %2217 = vmatmul.bf16.gmra.mxu0 %v2046
    %v2218 = vpop.f32.mrf.mxu0
    %v2219 = vadd.f32 0.0, %v2218
    %v2220 = vpop.f32.mrf.mxu0
    %2221 = vdwg.mxu0
    %v2222 = vadd.f32 %v300, %v2180
    %v2223 = vadd.f32 %v301, %v2193
    %v2224 = vadd.f32 %v302, %v2206
    %v2225 = vadd.f32 %v303, %v2219
    %v2226 = vmul.f32 %v2222, 0.5
    %v2227 = vmul.f32 %v2223, 0.5
    %v2228 = vmul.f32 %v2224, 0.5
    %v2229 = vtanh.pop %v2226
    %v2230 = vtanh.pop %v2227
    %v2231 = vtanh.pop %v2228
    %v2232 = vadd.f32 %v2229, 1.0
    %v2233 = vadd.f32 %v2230, 1.0
    %v2234 = vadd.f32 %v2231, 1.0
    %v2235 = vmul.f32 %v2232, 0.5
    %v2236 = vmul.f32 %v2233, 0.5
    %v2237 = vmul.f32 %v2234, 0.5
    %v2238 = vtanh.pop %v2225
    %v2239 = vmul.f32 %v2236, %v2043
    %v2240 = vmul.f32 %v2235, %v2238
    %v2241 = vadd.f32 %v2239, %v2240
    %v2242 = vtanh.pop %v2241
    %v2243 = vmul.f32 %v2237, %v2242
    %v2244 = vpack.c.bf16 %v2243, %v2243
    %v2245 = vpack.c.bf16 %v2169, %v2169
    %2246 = vmatpush.bf16.msra.mxu0 %v760
    %2247 = vmatpush.bf16.msra.mxu0 %v756
    %2248 = vmatpush.bf16.msra.mxu0 %v752
    %2249 = vmatpush.bf16.msra.mxu0 %v748
    %2250 = vmatpush.bf16.msra.mxu0 %v744
    %2251 = vmatpush.bf16.msra.mxu0 %v740
    %2252 = vmatpush.bf16.msra.mxu0 %v736
    %2253 = vmatpush.bf16.msra.mxu0 %v732
    %2254 = vmatmul.bf16.gmra.mxu0 %v2244
    %v2255 = vpop.f32.mrf.mxu0
    %v2256 = vadd.f32 %v164, %v2255
    %v2257 = vpop.f32.mrf.mxu0
    %2258 = vdwg.mxu0
    %2259 = vmatpush.bf16.msra.mxu0 %v792
    %2260 = vmatpush.bf16.msra.mxu0 %v788
    %2261 = vmatpush.bf16.msra.mxu0 %v784
    %2262 = vmatpush.bf16.msra.mxu0 %v780
    %2263 = vmatpush.bf16.msra.mxu0 %v776
    %2264 = vmatpush.bf16.msra.mxu0 %v772
    %2265 = vmatpush.bf16.msra.mxu0 %v768
    %2266 = vmatpush.bf16.msra.mxu0 %v764
    %2267 = vmatmul.bf16.gmra.mxu0 %v2245
    %v2268 = vpop.f32.mrf.mxu0
    %v2269 = vadd.f32 %v2256, %v2268
    %v2270 = vpop.f32.mrf.mxu0
    %2271 = vdwg.mxu0
    %2272 = vmatpush.bf16.msra.mxu0 %v761
    %2273 = vmatpush.bf16.msra.mxu0 %v757
    %2274 = vmatpush.bf16.msra.mxu0 %v753
    %2275 = vmatpush.bf16.msra.mxu0 %v749
    %2276 = vmatpush.bf16.msra.mxu0 %v745
    %2277 = vmatpush.bf16.msra.mxu0 %v741
    %2278 = vmatpush.bf16.msra.mxu0 %v737
    %2279 = vmatpush.bf16.msra.mxu0 %v733
    %2280 = vmatmul.bf16.gmra.mxu0 %v2244
    %v2281 = vpop.f32.mrf.mxu0
    %v2282 = vadd.f32 %v165, %v2281
    %v2283 = vpop.f32.mrf.mxu0
    %2284 = vdwg.mxu0
    %2285 = vmatpush.bf16.msra.mxu0 %v793
    %2286 = vmatpush.bf16.msra.mxu0 %v789
    %2287 = vmatpush.bf16.msra.mxu0 %v785
    %2288 = vmatpush.bf16.msra.mxu0 %v781
    %2289 = vmatpush.bf16.msra.mxu0 %v777
    %2290 = vmatpush.bf16.msra.mxu0 %v773
    %2291 = vmatpush.bf16.msra.mxu0 %v769
    %2292 = vmatpush.bf16.msra.mxu0 %v765
    %2293 = vmatmul.bf16.gmra.mxu0 %v2245
    %v2294 = vpop.f32.mrf.mxu0
    %v2295 = vadd.f32 %v2282, %v2294
    %v2296 = vpop.f32.mrf.mxu0
    %2297 = vdwg.mxu0
    %2298 = vmatpush.bf16.msra.mxu0 %v762
    %2299 = vmatpush.bf16.msra.mxu0 %v758
    %2300 = vmatpush.bf16.msra.mxu0 %v754
    %2301 = vmatpush.bf16.msra.mxu0 %v750
    %2302 = vmatpush.bf16.msra.mxu0 %v746
    %2303 = vmatpush.bf16.msra.mxu0 %v742
    %2304 = vmatpush.bf16.msra.mxu0 %v738
    %2305 = vmatpush.bf16.msra.mxu0 %v734
    %2306 = vmatmul.bf16.gmra.mxu0 %v2244
    %v2307 = vpop.f32.mrf.mxu0
    %v2308 = vadd.f32 %v166, %v2307
    %v2309 = vpop.f32.mrf.mxu0
    %2310 = vdwg.mxu0
    %2311 = vmatpush.bf16.msra.mxu0 %v794
    %2312 = vmatpush.bf16.msra.mxu0 %v790
    %2313 = vmatpush.bf16.msra.mxu0 %v786
    %2314 = vmatpush.bf16.msra.mxu0 %v782
    %2315 = vmatpush.bf16.msra.mxu0 %v778
    %2316 = vmatpush.bf16.msra.mxu0 %v774
    %2317 = vmatpush.bf16.msra.mxu0 %v770
    %2318 = vmatpush.bf16.msra.mxu0 %v766
    %2319 = vmatmul.bf16.gmra.mxu0 %v2245
    %v2320 = vpop.f32.mrf.mxu0
    %v2321 = vadd.f32 %v2308, %v2320
    %v2322 = vpop.f32.mrf.mxu0
    %2323 = vdwg.mxu0
    %2324 = vmatpush.bf16.msra.mxu0 %v763
    %2325 = vmatpush.bf16.msra.mxu0 %v759
    %2326 = vmatpush.bf16.msra.mxu0 %v755
    %2327 = vmatpush.bf16.msra.mxu0 %v751
    %2328 = vmatpush.bf16.msra.mxu0 %v747
    %2329 = vmatpush.bf16.msra.mxu0 %v743
    %2330 = vmatpush.bf16.msra.mxu0 %v739
    %2331 = vmatpush.bf16.msra.mxu0 %v735
    %2332 = vmatmul.bf16.gmra.mxu0 %v2244
    %v2333 = vpop.f32.mrf.mxu0
    %v2334 = vadd.f32 %v167, %v2333
    %v2335 = vpop.f32.mrf.mxu0
    %2336 = vdwg.mxu0
    %2337 = vmatpush.bf16.msra.mxu0 %v795
    %2338 = vmatpush.bf16.msra.mxu0 %v791
    %2339 = vmatpush.bf16.msra.mxu0 %v787
    %2340 = vmatpush.bf16.msra.mxu0 %v783
    %2341 = vmatpush.bf16.msra.mxu0 %v779
    %2342 = vmatpush.bf16.msra.mxu0 %v775
    %2343 = vmatpush.bf16.msra.mxu0 %v771
    %2344 = vmatpush.bf16.msra.mxu0 %v767
    %2345 = vmatmul.bf16.gmra.mxu0 %v2245
    %v2346 = vpop.f32.mrf.mxu0
    %v2347 = vadd.f32 %v2334, %v2346
    %v2348 = vpop.f32.mrf.mxu0
    %2349 = vdwg.mxu0
    %v2350 = vmul.f32 %v2269, 0.5
    %v2351 = vmul.f32 %v2295, 0.5
    %v2352 = vmul.f32 %v2321, 0.5
    %v2353 = vtanh.pop %v2350
    %v2354 = vtanh.pop %v2351
    %v2355 = vtanh.pop %v2352
    %v2356 = vadd.f32 %v2353, 1.0
    %v2357 = vadd.f32 %v2354, 1.0
    %v2358 = vadd.f32 %v2355, 1.0
    %v2359 = vmul.f32 %v2356, 0.5
    %v2360 = vmul.f32 %v2357, 0.5
    %v2361 = vmul.f32 %v2358, 0.5
    %v2362 = vtanh.pop %v2347
    %v2363 = vmul.f32 %v2360, %v2167
    %v2364 = vmul.f32 %v2359, %v2362
    %v2365 = vadd.f32 %v2363, %v2364
    %v2366 = vtanh.pop %v2365
    %v2367 = vmul.f32 %v2361, %v2366
    %v2369 = vperm.slane %v172, 0
    %v2371 = vmul.f32 %v2367, %v2369
    %2372 = vadd.xlane.f32.xlu0 %v2371
    %v2373 = vpop.xlane.xlu0 %2372
    %v2375 = vperm.slane %v173, 0
    %v2377 = vadd.f32 %v2373, %v2375
    %vm2378 = vcmask 7168
    %2379 = vst.msk [vmem:[%s8] sm:$0xff] %vm2378, %v2377
    // Predicated region
    $region42: #{lstm_model_forward.1} parent=1 // pred_check
      _
    $region43: #{lstm_model_forward.1} parent=1 // pred_check_branch
      %2381 = sbr.rel (0) target = $region45
    $region44: #{lstm_model_forward.1} parent=1 // pred_region
      _
    $region45: #{lstm_model_forward.1} parent=1 // pred_fallthru
      _
    // Predicated region
    $region46: #{lstm_model_forward.1} parent=1 // pred_check
      _
    $region47: #{lstm_model_forward.1} parent=1 // pred_check_branch
      %2383 = sbr.rel (0) target = $region49
    $region48: #{lstm_model_forward.1} parent=1 // pred_region
      _
    $region49: #{lstm_model_forward.1} parent=1 // pred_fallthru
      _
    %2384 = vsyncpa [#allocation4], 1
    %2385 = vsyncpa [#allocation6], 1

</llo_original>
